<compile_context>
chip_gen: v6e
topology: v6e:2x2x1
jax: 0.10.0
libtpu: 0.0.40
codegen_flags: <defaults>
</compile_context>

<pallas_src>
import numpy as np
import jax
import jax.numpy as jnp
from jax import lax
from jax.experimental import pallas as pl
from jax.experimental.pallas import tpu as pltpu


# Set to jnp.bfloat16 on v6e/v7x to keep the EUP off the critical path; keep
# f32 for v5e (no bf16 EUP) and for tight accuracy vs the f32 reference.
_EXP_DTYPE = jnp.float32


# ---------------------------------------------------------------------------
# Kernel 1: fused q/k/v projections + RoPE, one (batch, q-tile) per grid step.
#   wq2 = [Wq*sqrt(d) | Wq*sqrt(d)@P]  (H, 2H)   (P = block-diag rotate_half)
#   wk2 = [Wk         | Wk@P        ]  (H, 2H)
# so q_embed = yq[:, :H]*cos + yq[:, H:]*sin with a single matmul per pair.
# ---------------------------------------------------------------------------
def _qkv_rope_kernel(x_ref, wq2_ref, wk2_ref, wv_ref, cos_ref, sin_ref,
                     q_ref, k_ref, v_ref):
    H = q_ref.shape[-1]
    d = cos_ref.shape[-1]
    n_rep = H // d

    x = x_ref[...]                                                   # (bq, H) bf16
    cos = jnp.concatenate([cos_ref[...]] * n_rep, axis=-1)           # (bq, H) f32
    sin = jnp.concatenate([sin_ref[...]] * n_rep, axis=-1)

    yq = jnp.dot(x, wq2_ref[...], preferred_element_type=jnp.float32)  # (bq, 2H)
    q_ref[...] = (yq[:, :H] * cos + yq[:, H:] * sin).astype(jnp.bfloat16)

    yk = jnp.dot(x, wk2_ref[...], preferred_element_type=jnp.float32)
    k_ref[...] = (yk[:, :H] * cos + yk[:, H:] * sin).astype(jnp.bfloat16)

    v_ref[...] = jnp.dot(x, wv_ref[...],
                         preferred_element_type=jnp.float32).astype(jnp.bfloat16)


# ---------------------------------------------------------------------------
# Kernel 2: flash-style attention over all heads + fused output projection.
# grid = (B, q_tiles, kv_tiles).  Heads are a short static in-kernel loop so
# the concatenated head outputs land at *static* lane offsets of a (bq, H)
# VMEM scratch; the Wo projection is a single full-depth (bq,H)@(H,H) matmul
# at the last kv step (MXU runs at full contraction depth, no per-head RMW).
# ---------------------------------------------------------------------------
def _flash_attn_o_kernel(q_ref, k_ref, v_ref, wo_ref, o_ref,
                         m_sc, l_sc, acc_sc, heads_sc):
    ki = pl.program_id(2)
    nk = pl.num_programs(2)
    n_heads, _, d = acc_sc.shape

    @pl.when(ki == 0)
    def _init():
        m_sc[...] = jnp.full_like(m_sc, -jnp.inf)
        l_sc[...] = jnp.zeros_like(l_sc)
        acc_sc[...] = jnp.zeros_like(acc_sc)

    q = q_ref[...]                                                   # (bq, H) bf16
    k = k_ref[...]                                                   # (bk, H) bf16
    v = v_ref[...]                                                   # (bk, H) bf16

    for h in range(n_heads):                                         # static unroll
        sl = slice(h * d, (h + 1) * d)
        # logits = q_h @ k_h^T  (the module's 1/scale is folded into Wq)
        s = lax.dot_general(q[:, sl], k[:, sl],
                            (((1,), (1,)), ((), ())),
                            preferred_element_type=jnp.float32)      # (bq, bk)
        m_prev = m_sc[h]                                             # (bq, 1)
        m_new = jnp.maximum(m_prev, jnp.max(s, axis=-1, keepdims=True))
        alpha = jnp.exp(m_prev - m_new)
        p = jnp.exp((s - m_new).astype(_EXP_DTYPE)).astype(jnp.float32)
        l_sc[h] = alpha * l_sc[h] + jnp.sum(p, axis=-1, keepdims=True)
        acc_sc[h] = alpha * acc_sc[h] + jnp.dot(
            p.astype(jnp.bfloat16), v[:, sl],
            preferred_element_type=jnp.float32)
        m_sc[h] = m_new

    @pl.when(ki == nk - 1)
    def _finalize():
        for h in range(n_heads):
            head_out = acc_sc[h] * pl.reciprocal(l_sc[h], approx=True)   # (bq, d)
            heads_sc[:, h * d:(h + 1) * d] = head_out.astype(jnp.bfloat16)
        # One full-depth output projection, f32 accumulation, bf16 writeback.
        o_ref[...] = jnp.dot(heads_sc[...], wo_ref[...],
                             preferred_element_type=jnp.float32
                             ).astype(o_ref.dtype)


# ---------------------------------------------------------------------------
# Wrapper helpers
# ---------------------------------------------------------------------------
def _vmem_limit_bytes():
    # ~96 MiB on 128-MiB-VMEM parts (v5e/v6e), ~48 MiB on 64-MiB v7x.
    try:
        cap = pltpu.get_tpu_info().vmem_capacity_bytes
    except Exception:
        cap = 64 * 1024 * 1024
    return int(min(cap * 3 // 4, 100 * 1024 * 1024))


def _pick_q_block(seq, batch, candidates=(1024, 512, 256, 128)):
    # Largest divisor that still leaves >= 2 parallel grid steps (v7x megacore).
    fallback = None
    for c in candidates:
        if seq % c == 0:
            if fallback is None:
                fallback = c
            if batch * (seq // c) >= 2:
                return c
    # TODO(synk): no masking path for seq lengths not divisible by 128.
    return fallback if fallback is not None else seq


def _pick_kv_block(seq, candidates=(1024, 512, 256, 128)):
    for c in candidates:
        if seq % c == 0:
            return c
    return seq


def make_rotate_half_matrix(head_dim, n_heads):
    # rotate_half(x) = concat([-x[..., 1::2], x[..., ::2]], -1) == x @ P
    half = head_dim // 2
    P = np.zeros((head_dim, head_dim), dtype=np.float32)
    for i in range(half):
        P[2 * i + 1, i] = -1.0          # first half:  -odd elements
        P[2 * i, half + i] = 1.0        # second half:  even elements
    # block-diagonal over heads so it folds into the full (H, H) weights
    return jnp.asarray(np.kron(np.eye(n_heads, dtype=np.float32), P))


def make_rope_cache(seq_len, head_dim, base=10000.0):
    # LlamaDynamicNTKScalingRotaryEmbedding with seq_len <= max_position_embeddings
    # reduces to the standard cache (no NTK rescaling).
    inv_freq = 1.0 / (base ** (jnp.arange(0, head_dim, 2, dtype=jnp.float32) / head_dim))
    t = jnp.arange(seq_len, dtype=jnp.float32)
    freqs = jnp.einsum('i,j->ij', t, inv_freq)
    emb = jnp.concatenate([freqs, freqs], axis=-1)                  # (S, head_dim)
    return jnp.cos(emb), jnp.sin(emb)


# ---------------------------------------------------------------------------
# Forward
# ---------------------------------------------------------------------------
def attention_forward(x, wq, wk, wv, wo, cos, sin, *, n_heads,
                      block_q=None, block_kv=None):
    B, S, H = x.shape
    d = H // n_heads
    assert n_heads * d == H

    bq = block_q if block_q is not None else _pick_q_block(S, B)
    bk = block_kv if block_kv is not None else _pick_kv_block(S)
    assert S % bq == 0 and S % bk == 0

    # ---- wrapper-side weight / cache preprocessing (layout plumbing) ----
    sqrt_d = float(d) ** 0.5
    P = make_rotate_half_matrix(d, n_heads)                         # exact signed perm
    wq_s = wq * sqrt_d                                              # fold division by scale
    wq2 = jnp.concatenate([wq_s, wq_s @ P], axis=1).astype(jnp.bfloat16)   # (H, 2H)
    wk2 = jnp.concatenate([wk, wk @ P], axis=1).astype(jnp.bfloat16)       # (H, 2H)
    wv_b = wv.astype(jnp.bfloat16)
    wo_b = wo.astype(jnp.bfloat16)
    x_b = x.astype(jnp.bfloat16)
    cos_f = cos.astype(jnp.float32)                                  # (S, d)
    sin_f = sin.astype(jnp.float32)

    vmem_limit = _vmem_limit_bytes()

    # ---- kernel 1: fused q/k/v projections + RoPE ----
    q, k, v = pl.pallas_call(
        _qkv_rope_kernel,
        out_shape=(jax.ShapeDtypeStruct((B, S, H), jnp.bfloat16),) * 3,
        grid_spec=pltpu.PrefetchScalarGridSpec(
            num_scalar_prefetch=0,
            grid=(B, S // bq),
            in_specs=[
                pl.BlockSpec((None, bq, H), lambda b, i: (b, i, 0)),    # x (bf16)
                pl.BlockSpec((H, 2 * H), lambda b, i: (0, 0)),          # [Wq*sqrt(d)|..@P]
                pl.BlockSpec((H, 2 * H), lambda b, i: (0, 0)),          # [Wk|Wk@P]
                pl.BlockSpec((H, H), lambda b, i: (0, 0)),              # Wv
                pl.BlockSpec((bq, d), lambda b, i: (i, 0)),             # cos (S, d)
                pl.BlockSpec((bq, d), lambda b, i: (i, 0)),             # sin (S, d)
            ],
            out_specs=[pl.BlockSpec((None, bq, H), lambda b, i: (b, i, 0))] * 3,
        ),
        compiler_params=pltpu.CompilerParams(
            dimension_semantics=("parallel", "parallel"),
            vmem_limit_bytes=vmem_limit),
    )(x_b, wq2, wk2, wv_b, cos_f, sin_f)

    # ---- kernel 2: flash attention (all heads) + fused output projection ----
    out = pl.pallas_call(
        _flash_attn_o_kernel,
        out_shape=jax.ShapeDtypeStruct((B, S, H), jnp.bfloat16),
        grid_spec=pltpu.PrefetchScalarGridSpec(
            num_scalar_prefetch=0,
            grid=(B, S // bq, S // bk),
            in_specs=[
                pl.BlockSpec((None, bq, H), lambda b, qi, ki: (b, qi, 0)),  # q
                pl.BlockSpec((None, bk, H), lambda b, qi, ki: (b, ki, 0)),  # k
                pl.BlockSpec((None, bk, H), lambda b, qi, ki: (b, ki, 0)),  # v
                pl.BlockSpec((H, H), lambda b, qi, ki: (0, 0)),             # Wo (resident)
            ],
            out_specs=pl.BlockSpec((None, bq, H), lambda b, qi, ki: (b, qi, 0)),
            scratch_shapes=[
                pltpu.VMEM((n_heads, bq, 1), jnp.float32),   # running max per head
                pltpu.VMEM((n_heads, bq, 1), jnp.float32),   # running denom per head
                pltpu.VMEM((n_heads, bq, d), jnp.float32),   # running p@v per head
                pltpu.VMEM((bq, H), jnp.bfloat16),           # concatenated head outputs
            ],
        ),
        compiler_params=pltpu.CompilerParams(
            dimension_semantics=("parallel", "parallel", "arbitrary"),
            vmem_limit_bytes=vmem_limit),
    )(q, k, v, wo_b)
    return out


# ---------------------------------------------------------------------------
# Pure-JAX f32 reference (mirrors the PyTorch forward)
# ---------------------------------------------------------------------------
def reference_forward(x, wq, wk, wv, wo, cos, sin, n_heads):
    B, S, H = x.shape
    d = H // n_heads
    q = (x @ wq).reshape(B, S, n_heads, d).transpose(0, 2, 1, 3)
    k = (x @ wk).reshape(B, S, n_heads, d).transpose(0, 2, 1, 3)
    v = (x @ wv).reshape(B, S, n_heads, d).transpose(0, 2, 1, 3)

    def rot(t):
        return jnp.concatenate([-t[..., 1::2], t[..., ::2]], axis=-1)

    q = q * cos + rot(q) * sin
    k = k * cos + rot(k) * sin
    scale = d ** (-0.5)
    w = jnp.einsum('bhsd,bhtd->bhst', q, k) / scale      # module divides by scale
    w = jax.nn.softmax(w, axis=-1)
    o = jnp.einsum('bhst,bhtd->bhsd', w, v)
    o = o.transpose(0, 2, 1, 3).reshape(B, S, H)
    return o @ wo


# ---------------------------------------------------------------------------
if __name__ == "__main__":
    # max_T == q_len == S (required by the module's cos[position_ids] broadcast).
    # head_dim=128 keeps head slices lane-tile aligned; bq=bk=128 exercises the
    # multi-tile online-softmax path (2 q tiles x 2 kv tiles per batch).
    B, S, H, n_heads = 2, 256, 256, 2
    head_dim = H // n_heads

    key = jax.random.PRNGKey(0)
    kx, kq, kk, kv, ko = jax.random.split(key, 5)

    x = jax.random.normal(kx, (B, S, H), dtype=jnp.float32)
    # Deterministic synthetic weights stored as (in, out), i.e. PyTorch weight.T.
    # Small q/k scales keep the module's (logits * sqrt(d)) in a benign range.
    wq = jax.random.normal(kq, (H, H), dtype=jnp.float32) * 0.005
    wk = jax.random.normal(kk, (H, H), dtype=jnp.float32) * 0.005
    wv = jax.random.normal(kv, (H, H), dtype=jnp.float32) * 0.05
    wo = jax.random.normal(ko, (H, H), dtype=jnp.float32) * 0.1

    cos, sin = make_rope_cache(S, head_dim)

    out = attention_forward(x, wq, wk, wv, wo, cos, sin, n_heads=n_heads,
                            block_q=128, block_kv=128)
    out = jax.block_until_ready(out)

    ref = reference_forward(x, wq, wk, wv, wo, cos, sin, n_heads)
    # bf16 MXU operands / bf16 output + approximate reciprocal -> loosened
    # tolerance vs the f32 reference.
    np.testing.assert_allclose(np.asarray(out.astype(jnp.float32)),
                               np.asarray(ref), rtol=2e-2, atol=2e-2)
    print("KERNEL_OK")
</pallas_src>

<mosaic_0001>
module attributes {stable_mosaic.version = 11 : i64} {
  func.func @_qkv_rope_kernel(%arg0: i32, %arg1: i32, %arg2: memref<1x128x256xbf16, #tpu.memory_space<vmem>>, %arg3: memref<256x512xbf16, #tpu.memory_space<vmem>>, %arg4: memref<256x512xbf16, #tpu.memory_space<vmem>>, %arg5: memref<256x256xbf16, #tpu.memory_space<vmem>>, %arg6: memref<128x128xf32, #tpu.memory_space<vmem>>, %arg7: memref<128x128xf32, #tpu.memory_space<vmem>>, %arg8: memref<1x128x256xbf16, #tpu.memory_space<vmem>>, %arg9: memref<1x128x256xbf16, #tpu.memory_space<vmem>>, %arg10: memref<1x128x256xbf16, #tpu.memory_space<vmem>>) attributes {dimension_semantics = [#tpu.dimension_semantics<parallel>, #tpu.dimension_semantics<parallel>], iteration_bounds = array<i64: 2, 2>, scalar_prefetch = 0 : i64, scratch_operands = 0 : i64, tpu.core_type = #tpu.core_type<tc>, window_params = [{transform_indices = @transform_0, window_bounds = array<i64: 1, 128, 256>}, {pipeline_mode = #tpu.pipeline_mode<synchronous>, transform_indices = @transform_1, window_bounds = array<i64: 256, 512>}, {pipeline_mode = #tpu.pipeline_mode<synchronous>, transform_indices = @transform_2, window_bounds = array<i64: 256, 512>}, {pipeline_mode = #tpu.pipeline_mode<synchronous>, transform_indices = @transform_3, window_bounds = array<i64: 256, 256>}, {transform_indices = @transform_4, window_bounds = array<i64: 128, 128>}, {transform_indices = @transform_5, window_bounds = array<i64: 128, 128>}, {transform_indices = @transform_6, window_bounds = array<i64: 1, 128, 256>}, {transform_indices = @transform_7, window_bounds = array<i64: 1, 128, 256>}, {transform_indices = @transform_8, window_bounds = array<i64: 1, 128, 256>}]} {
    %c0 = arith.constant 0 : index
    %c0_0 = arith.constant 0 : index
    %c0_1 = arith.constant 0 : index
    %0 = vector.load %arg2[%c0, %c0_0, %c0_1] : memref<1x128x256xbf16, #tpu.memory_space<vmem>>, vector<1x128x256xbf16>
    %1 = vector.shape_cast %0 : vector<1x128x256xbf16> to vector<128x256xbf16>
    %c0_2 = arith.constant 0 : index
    %c0_3 = arith.constant 0 : index
    %2 = vector.load %arg6[%c0_2, %c0_3] : memref<128x128xf32, #tpu.memory_space<vmem>>, vector<128x128xf32>
    %3 = tpu.concatenate %2, %2 in 1 : vector<128x128xf32>, vector<128x128xf32> -> vector<128x256xf32>
    %c0_4 = arith.constant 0 : index
    %c0_5 = arith.constant 0 : index
    %4 = vector.load %arg7[%c0_4, %c0_5] : memref<128x128xf32, #tpu.memory_space<vmem>>, vector<128x128xf32>
    %5 = tpu.concatenate %4, %4 in 1 : vector<128x128xf32>, vector<128x128xf32> -> vector<128x256xf32>
    %c0_6 = arith.constant 0 : index
    %c0_7 = arith.constant 0 : index
    %6 = vector.load %arg3[%c0_6, %c0_7] : memref<256x512xbf16, #tpu.memory_space<vmem>>, vector<256x512xbf16>
    %cst = arith.constant dense<0.000000e+00> : vector<128x512xf32>
    %7 = tpu.matmul %1, %6, %cst {dimension_numbers = #tpu.dot_dimension_numbers<[1], [0], [0], [1], [0, 0, 1, 1], [], []>} : vector<128x256xbf16>, vector<256x512xbf16>, vector<128x512xf32> -> vector<128x512xf32>
    %8 = vector.extract_strided_slice %7 {offsets = [0, 0], sizes = [128, 256], strides = [1, 1]} : vector<128x512xf32> to vector<128x256xf32>
    %9 = arith.mulf %8, %3 : vector<128x256xf32>
    %10 = vector.extract_strided_slice %7 {offsets = [0, 256], sizes = [128, 256], strides = [1, 1]} : vector<128x512xf32> to vector<128x256xf32>
    %11 = arith.mulf %10, %5 : vector<128x256xf32>
    %12 = arith.addf %9, %11 : vector<128x256xf32>
    %13 = arith.truncf %12 : vector<128x256xf32> to vector<128x256xbf16>
    %c0_8 = arith.constant 0 : index
    %c0_9 = arith.constant 0 : index
    %c0_10 = arith.constant 0 : index
    %14 = vector.load %arg8[%c0_8, %c0_9, %c0_10] : memref<1x128x256xbf16, #tpu.memory_space<vmem>>, vector<1x128x256xbf16>
    %15 = vector.shape_cast %14 : vector<1x128x256xbf16> to vector<128x256xbf16>
    %16 = vector.shape_cast %13 : vector<128x256xbf16> to vector<1x128x256xbf16>
    tpu.vector_store %arg8[%c0_8, %c0_9, %c0_10], %16 {strides = array<i32>} : memref<1x128x256xbf16, #tpu.memory_space<vmem>>, vector<1x128x256xbf16>,
    %c0_11 = arith.constant 0 : index
    %c0_12 = arith.constant 0 : index
    %17 = vector.load %arg4[%c0_11, %c0_12] : memref<256x512xbf16, #tpu.memory_space<vmem>>, vector<256x512xbf16>
    %cst_13 = arith.constant dense<0.000000e+00> : vector<128x512xf32>
    %18 = tpu.matmul %1, %17, %cst_13 {dimension_numbers = #tpu.dot_dimension_numbers<[1], [0], [0], [1], [0, 0, 1, 1], [], []>} : vector<128x256xbf16>, vector<256x512xbf16>, vector<128x512xf32> -> vector<128x512xf32>
    %19 = vector.extract_strided_slice %18 {offsets = [0, 0], sizes = [128, 256], strides = [1, 1]} : vector<128x512xf32> to vector<128x256xf32>
    %20 = arith.mulf %19, %3 : vector<128x256xf32>
    %21 = vector.extract_strided_slice %18 {offsets = [0, 256], sizes = [128, 256], strides = [1, 1]} : vector<128x512xf32> to vector<128x256xf32>
    %22 = arith.mulf %21, %5 : vector<128x256xf32>
    %23 = arith.addf %20, %22 : vector<128x256xf32>
    %24 = arith.truncf %23 : vector<128x256xf32> to vector<128x256xbf16>
    %c0_14 = arith.constant 0 : index
    %c0_15 = arith.constant 0 : index
    %c0_16 = arith.constant 0 : index
    %25 = vector.load %arg9[%c0_14, %c0_15, %c0_16] : memref<1x128x256xbf16, #tpu.memory_space<vmem>>, vector<1x128x256xbf16>
    %26 = vector.shape_cast %25 : vector<1x128x256xbf16> to vector<128x256xbf16>
    %27 = vector.shape_cast %24 : vector<128x256xbf16> to vector<1x128x256xbf16>
    tpu.vector_store %arg9[%c0_14, %c0_15, %c0_16], %27 {strides = array<i32>} : memref<1x128x256xbf16, #tpu.memory_space<vmem>>, vector<1x128x256xbf16>,
    %c0_17 = arith.constant 0 : index
    %c0_18 = arith.constant 0 : index
    %28 = vector.load %arg5[%c0_17, %c0_18] : memref<256x256xbf16, #tpu.memory_space<vmem>>, vector<256x256xbf16>
    %cst_19 = arith.constant dense<0.000000e+00> : vector<128x256xf32>
    %29 = tpu.matmul %1, %28, %cst_19 {dimension_numbers = #tpu.dot_dimension_numbers<[1], [0], [0], [1], [0, 0, 1, 1], [], []>} : vector<128x256xbf16>, vector<256x256xbf16>, vector<128x256xf32> -> vector<128x256xf32>
    %30 = arith.truncf %29 : vector<128x256xf32> to vector<128x256xbf16>
    %c0_20 = arith.constant 0 : index
    %c0_21 = arith.constant 0 : index
    %c0_22 = arith.constant 0 : index
    %31 = vector.load %arg10[%c0_20, %c0_21, %c0_22] : memref<1x128x256xbf16, #tpu.memory_space<vmem>>, vector<1x128x256xbf16>
    %32 = vector.shape_cast %31 : vector<1x128x256xbf16> to vector<128x256xbf16>
    %33 = vector.shape_cast %30 : vector<128x256xbf16> to vector<1x128x256xbf16>
    tpu.vector_store %arg10[%c0_20, %c0_21, %c0_22], %33 {strides = array<i32>} : memref<1x128x256xbf16, #tpu.memory_space<vmem>>, vector<1x128x256xbf16>,
    return
  }
  func.func @transform_0(%arg0: i32, %arg1: i32) -> (i32, i32, i32) {
    %c0_i32 = arith.constant 0 : i32
    %c0_i32_0 = arith.constant 0 : i32
    return %arg0, %arg1, %c0_i32 : i32, i32, i32
  }
  func.func @transform_1(%arg0: i32, %arg1: i32) -> (i32, i32) {
    %c0_i32 = arith.constant 0 : i32
    %c0_i32_0 = arith.constant 0 : i32
    %c0_i32_1 = arith.constant 0 : i32
    return %c0_i32, %c0_i32_0 : i32, i32
  }
  func.func @transform_2(%arg0: i32, %arg1: i32) -> (i32, i32) {
    %c0_i32 = arith.constant 0 : i32
    %c0_i32_0 = arith.constant 0 : i32
    %c0_i32_1 = arith.constant 0 : i32
    return %c0_i32, %c0_i32_0 : i32, i32
  }
  func.func @transform_3(%arg0: i32, %arg1: i32) -> (i32, i32) {
    %c0_i32 = arith.constant 0 : i32
    %c0_i32_0 = arith.constant 0 : i32
    %c0_i32_1 = arith.constant 0 : i32
    return %c0_i32, %c0_i32_0 : i32, i32
  }
  func.func @transform_4(%arg0: i32, %arg1: i32) -> (i32, i32) {
    %c0_i32 = arith.constant 0 : i32
    %c0_i32_0 = arith.constant 0 : i32
    return %arg1, %c0_i32 : i32, i32
  }
  func.func @transform_5(%arg0: i32, %arg1: i32) -> (i32, i32) {
    %c0_i32 = arith.constant 0 : i32
    %c0_i32_0 = arith.constant 0 : i32
    return %arg1, %c0_i32 : i32, i32
  }
  func.func @transform_6(%arg0: i32, %arg1: i32) -> (i32, i32, i32) {
    %c0_i32 = arith.constant 0 : i32
    %c0_i32_0 = arith.constant 0 : i32
    return %arg0, %arg1, %c0_i32 : i32, i32, i32
  }
  func.func @transform_7(%arg0: i32, %arg1: i32) -> (i32, i32, i32) {
    %c0_i32 = arith.constant 0 : i32
    %c0_i32_0 = arith.constant 0 : i32
    return %arg0, %arg1, %c0_i32 : i32, i32, i32
  }
  func.func @transform_8(%arg0: i32, %arg1: i32) -> (i32, i32, i32) {
    %c0_i32 = arith.constant 0 : i32
    %c0_i32_0 = arith.constant 0 : i32
    return %arg0, %arg1, %c0_i32 : i32, i32, i32
  }
}

</mosaic_0001>

<llo_original>
// kernel: tpu_custom_call.1
$region0: #{tpu_custom_call.1}
  #allocation0 [shape = 'u32[]', space=smem, size = 0x4, offset = 0x4, fixed_abs, tag = 'smem constant byte address 0x4 - core index']
  #allocation1 [shape = 'u32[144,128]{1,0:T(1,128)}', space=vmem, size = 0x12000, scoped, tag = 'internal scratch']
  %s0 = inlined_call_operand.hbm [shape: bf16[2,256,256], index: 0, kind: input, shape index: {}]
  %s1 = inlined_call_operand.hbm [shape: bf16[256,512], index: 1, kind: input, shape index: {}]
  %s2 = inlined_call_operand.hbm [shape: bf16[256,512], index: 2, kind: input, shape index: {}]
  %s3 = inlined_call_operand.hbm [shape: bf16[256,256], index: 3, kind: input, shape index: {}]
  %s4 = inlined_call_operand.hbm [shape: f32[256,128], index: 4, kind: input, shape index: {}]
  %s5 = inlined_call_operand.hbm [shape: f32[256,128], index: 5, kind: input, shape index: {}]
  %s6 = inlined_call_operand.hbm [shape: bf16[2,256,256], index: 6, kind: output, shape index: {0}]
  %s7 = inlined_call_operand.hbm [shape: bf16[2,256,256], index: 7, kind: output, shape index: {1}]
  %s8 = inlined_call_operand.hbm [shape: bf16[2,256,256], index: 8, kind: output, shape index: {2}]
  %9 = xla_tuple %s6, %s7, %s8
  %s10 = sld [smem:[#allocation0]]
  $region97: #{tpu_custom_call.1} parent=0
    _
  %s12 = ssub.s32 1, %s10
  %s13 = scalar_select 0, %s12, %s10
  $region1: #{tpu_custom_call.1} parent=0
    #allocation2 [shape = 'u8[131072]{0}', space=vmem, size = 0x20000, scoped, tag = 'input window, operand 0']
    #allocation3 [shape = 's32[2]{0}', space=sflag, size = 0x8, scoped, tag = 'scoped memory for tpu_custom_call.1']
    #allocation4 [shape = 's32[2]{0}', space=sflag, size = 0x8, scoped, tag = 'scoped memory for tpu_custom_call.1']
    #allocation5 [shape = 'u8[262144]{0}', space=vmem, size = 0x40000, scoped, tag = 'input window, operand 1, single buffered']
    #allocation6 [shape = 's32[1]{0}', space=sflag, size = 0x4, scoped, tag = 'scoped memory for tpu_custom_call.1']
    #allocation7 [shape = 'u8[262144]{0}', space=vmem, size = 0x40000, scoped, tag = 'input window, operand 2, single buffered']
    #allocation8 [shape = 'u8[131072]{0}', space=vmem, size = 0x20000, scoped, tag = 'input window, operand 3, single buffered']
    #allocation9 [shape = 's32[1]{0}', space=sflag, size = 0x4, scoped, tag = 'scoped memory for tpu_custom_call.1']
    #allocation10 [shape = 'u8[131072]{0}', space=vmem, size = 0x20000, scoped, tag = 'input window, operand 4']
    #allocation11 [shape = 'u8[131072]{0}', space=vmem, size = 0x20000, scoped, tag = 'input window, operand 5']
    #allocation12 [shape = 'u8[131072]{0}', space=vmem, size = 0x20000, scoped, tag = 'output window, operand 0']
    #allocation13 [shape = 'u8[131072]{0}', space=vmem, size = 0x20000, scoped, tag = 'output window, operand 1']
    #allocation14 [shape = 's32[2]{0}', space=sflag, size = 0x8, scoped, tag = 'scoped memory for tpu_custom_call.1']
    #allocation15 [shape = 'u8[131072]{0}', space=vmem, size = 0x20000, scoped, tag = 'output window, operand 2']
    %14 = vsyncpa [#allocation3], 0
    %s15 = scalar_lea.sflag [#allocation3], 1
    %16 = vsyncpa %s15, 0
    %17 = vsyncpa [#allocation6], 0
    %18 = vsyncpa [#allocation9], 0
    %19 = vsyncpa [#allocation4], 0
    %s20 = scalar_lea.sflag [#allocation4], 1
    %21 = vsyncpa %s20, 0
    %22 = vsyncpa [#allocation14], 0
    %s23 = scalar_lea.sflag [#allocation14], 1
    %24 = vsyncpa %s23, 0
    loop: start=0, step=1, limit=6
    $region2: #{tpu_custom_call.1} parent=1 // loop_pre_header
      _
    $region3: #{tpu_custom_call.1} parent=1 // loop_header
      %s26 = sphi 0, %s30
      %p27 = scmp.ge.s32.totalorder %s26, 6
      %s33 = sphi 0, %s45
      %s34 = sphi 0, %s41
      %s35 = sphi 0, %s33
      %s36 = sphi 0, %s34
      %s37 = sphi 0, %s35
      %s38 = sphi 0, %s36
      %s50 = sphi 0, %s52
      %s53 = sphi 0, %s50
      %s54 = sphi 0, %s53
      %s70 = sphi 0, %s54
      %s74 = sphi 0, %s74
      %s76 = sphi 0, %s74
      %s77 = sphi 0, %s76
      %s91 = sphi 0, %s77
      %s95 = sphi 0, %s95
      %s97 = sphi 0, %s95
      %s98 = sphi 0, %s97
      %s112 = sphi 0, %s98
      %s116 = sphi 0, %s116
      %s118 = sphi 0, %s116
      %s119 = sphi 0, %s118
      %s133 = sphi 0, %s119
      %s139 = sphi 0, %s141
      %s142 = sphi 0, %s139
      %s143 = sphi 0, %s142
      %s159 = sphi 0, %s143
      %s165 = sphi 0, %s167
      %s168 = sphi 0, %s165
      %s169 = sphi 0, %s168
      %s185 = sphi 0, %s169
      %s193 = sphi 0, %s195
      %s196 = sphi 0, %s193
      %s197 = sphi 0, %s196
      %s213 = sphi 0, %s197
      %s221 = sphi 0, %s223
      %s224 = sphi 0, %s221
      %s225 = sphi 0, %s224
      %s241 = sphi 0, %s225
      %s249 = sphi 0, %s251
      %s252 = sphi 0, %s249
      %s253 = sphi 0, %s252
      %s269 = sphi 0, %s253
    $region4: #{tpu_custom_call.1} parent=1 // loop_header_branch
      %29 = sbr.rel (%p27) target = $region8
    $region5: #{tpu_custom_call.1} parent=1 // loop_body
      %s31 = ssub.s32 %s26, 1
      %s32 = ssub.s32 %s26, 2
      %s39 = sadd.s32 1, %s34
      %p40 = scmp.ge.s32.totalorder %s39, 2
      %s41 = scalar_select %p40, 0, %s39
      %s42 = sadd.s32 1, %s33
      %s43 = scalar_select %p40, %s42, %s33
      %p44 = scmp.ge.s32.totalorder %s43, 2
      %s45 = scalar_select %p44, 0, %s43
      %s46 = ssub.s32 %s33, %s45
      %s47 = ssub.s32 %s34, %s41
      %s48 = sor.u32 %s46, %s47
      %p49 = scmp.eq.s32.totalorder %s48, 0
      %s51 = sadd.s32 %s50, 1
      %s52 = scalar_select %p49, %s50, %s51
      %p55 = pneg %p49
      %p56 = scmp.eq.s32.totalorder %s26, 3
      %p57 = por %p55, %p56
      %p58 = scmp.ne.s32.totalorder %s50, %s53
      %p59 = scmp.eq.s32.totalorder %s26, 0
      %p60 = por %p58, %p59
      %p61 = scmp.ne.s32.totalorder %s50, %s53
      %p62 = scmp.eq.s32.totalorder %s31, 3
      %p63 = por %p61, %p62
      %p64 = scmp.ne.s32.totalorder %s53, %s54
      %p65 = scmp.eq.s32.totalorder %s31, 0
      %p66 = por %p64, %p65
      %p67 = scmp.ne.s32.totalorder %s53, %s54
      %p68 = scmp.eq.s32.totalorder %s32, 3
      %p69 = por %p67, %p68
      %p71 = scmp.ne.s32.totalorder %s54, %s70
      %p72 = scmp.eq.s32.totalorder %s32, 0
      %p73 = por %p71, %p72
      %s75 = sadd.s32 %s74, 1
      %p78 = scmp.eq.s32.totalorder %s26, 3
      %p79 = scmp.ne.s32.totalorder %s74, %s76
      %p80 = scmp.eq.s32.totalorder %s26, 0
      %p81 = por %p79, %p80
      %p82 = scmp.ne.s32.totalorder %s74, %s76
      %p83 = scmp.eq.s32.totalorder %s31, 3
      %p84 = por %p82, %p83
      %p85 = scmp.ne.s32.totalorder %s76, %s77
      %p86 = scmp.eq.s32.totalorder %s31, 0
      %p87 = por %p85, %p86
      %p88 = scmp.ne.s32.totalorder %s76, %s77
      %p89 = scmp.eq.s32.totalorder %s32, 3
      %p90 = por %p88, %p89
      %p92 = scmp.ne.s32.totalorder %s77, %s91
      %p93 = scmp.eq.s32.totalorder %s32, 0
      %p94 = por %p92, %p93
      %s96 = sadd.s32 %s95, 1
      %p99 = scmp.eq.s32.totalorder %s26, 3
      %p100 = scmp.ne.s32.totalorder %s95, %s97
      %p101 = scmp.eq.s32.totalorder %s26, 0
      %p102 = por %p100, %p101
      %p103 = scmp.ne.s32.totalorder %s95, %s97
      %p104 = scmp.eq.s32.totalorder %s31, 3
      %p105 = por %p103, %p104
      %p106 = scmp.ne.s32.totalorder %s97, %s98
      %p107 = scmp.eq.s32.totalorder %s31, 0
      %p108 = por %p106, %p107
      %p109 = scmp.ne.s32.totalorder %s97, %s98
      %p110 = scmp.eq.s32.totalorder %s32, 3
      %p111 = por %p109, %p110
      %p113 = scmp.ne.s32.totalorder %s98, %s112
      %p114 = scmp.eq.s32.totalorder %s32, 0
      %p115 = por %p113, %p114
      %s117 = sadd.s32 %s116, 1
      %p120 = scmp.eq.s32.totalorder %s26, 3
      %p121 = scmp.ne.s32.totalorder %s116, %s118
      %p122 = scmp.eq.s32.totalorder %s26, 0
      %p123 = por %p121, %p122
      %p124 = scmp.ne.s32.totalorder %s116, %s118
      %p125 = scmp.eq.s32.totalorder %s31, 3
      %p126 = por %p124, %p125
      %p127 = scmp.ne.s32.totalorder %s118, %s119
      %p128 = scmp.eq.s32.totalorder %s31, 0
      %p129 = por %p127, %p128
      %p130 = scmp.ne.s32.totalorder %s118, %s119
      %p131 = scmp.eq.s32.totalorder %s32, 3
      %p132 = por %p130, %p131
      %p134 = scmp.ne.s32.totalorder %s119, %s133
      %p135 = scmp.eq.s32.totalorder %s32, 0
      %p136 = por %p134, %p135
      %s137 = ssub.s32 %s34, %s41
      %p138 = scmp.eq.s32.totalorder %s137, 0
      %s140 = sadd.s32 %s139, 1
      %s141 = scalar_select %p138, %s139, %s140
      %p144 = pneg %p138
      %p145 = scmp.eq.s32.totalorder %s26, 3
      %p146 = por %p144, %p145
      %p147 = scmp.ne.s32.totalorder %s139, %s142
      %p148 = scmp.eq.s32.totalorder %s26, 0
      %p149 = por %p147, %p148
      %p150 = scmp.ne.s32.totalorder %s139, %s142
      %p151 = scmp.eq.s32.totalorder %s31, 3
      %p152 = por %p150, %p151
      %p153 = scmp.ne.s32.totalorder %s142, %s143
      %p154 = scmp.eq.s32.totalorder %s31, 0
      %p155 = por %p153, %p154
      %p156 = scmp.ne.s32.totalorder %s142, %s143
      %p157 = scmp.eq.s32.totalorder %s32, 3
      %p158 = por %p156, %p157
      %p160 = scmp.ne.s32.totalorder %s143, %s159
      %p161 = scmp.eq.s32.totalorder %s32, 0
      %p162 = por %p160, %p161
      %s163 = ssub.s32 %s34, %s41
      %p164 = scmp.eq.s32.totalorder %s163, 0
      %s166 = sadd.s32 %s165, 1
      %s167 = scalar_select %p164, %s165, %s166
      %p170 = pneg %p164
      %p171 = scmp.eq.s32.totalorder %s26, 3
      %p172 = por %p170, %p171
      %p173 = scmp.ne.s32.totalorder %s165, %s168
      %p174 = scmp.eq.s32.totalorder %s26, 0
      %p175 = por %p173, %p174
      %p176 = scmp.ne.s32.totalorder %s165, %s168
      %p177 = scmp.eq.s32.totalorder %s31, 3
      %p178 = por %p176, %p177
      %p179 = scmp.ne.s32.totalorder %s168, %s169
      %p180 = scmp.eq.s32.totalorder %s31, 0
      %p181 = por %p179, %p180
      %p182 = scmp.ne.s32.totalorder %s168, %s169
      %p183 = scmp.eq.s32.totalorder %s32, 3
      %p184 = por %p182, %p183
      %p186 = scmp.ne.s32.totalorder %s169, %s185
      %p187 = scmp.eq.s32.totalorder %s32, 0
      %p188 = por %p186, %p187
      %s189 = ssub.s32 %s33, %s45
      %s190 = ssub.s32 %s34, %s41
      %s191 = sor.u32 %s189, %s190
      %p192 = scmp.eq.s32.totalorder %s191, 0
      %s194 = sadd.s32 %s193, 1
      %s195 = scalar_select %p192, %s193, %s194
      %p198 = pneg %p192
      %p199 = scmp.eq.s32.totalorder %s26, 3
      %p200 = por %p198, %p199
      %p201 = scmp.ne.s32.totalorder %s193, %s196
      %p202 = scmp.eq.s32.totalorder %s26, 0
      %p203 = por %p201, %p202
      %p204 = scmp.ne.s32.totalorder %s193, %s196
      %p205 = scmp.eq.s32.totalorder %s31, 3
      %p206 = por %p204, %p205
      %p207 = scmp.ne.s32.totalorder %s196, %s197
      %p208 = scmp.eq.s32.totalorder %s31, 0
      %p209 = por %p207, %p208
      %p210 = scmp.ne.s32.totalorder %s196, %s197
      %p211 = scmp.eq.s32.totalorder %s32, 3
      %p212 = por %p210, %p211
      %p214 = scmp.ne.s32.totalorder %s197, %s213
      %p215 = scmp.eq.s32.totalorder %s32, 0
      %p216 = por %p214, %p215
      %s217 = ssub.s32 %s33, %s45
      %s218 = ssub.s32 %s34, %s41
      %s219 = sor.u32 %s217, %s218
      %p220 = scmp.eq.s32.totalorder %s219, 0
      %s222 = sadd.s32 %s221, 1
      %s223 = scalar_select %p220, %s221, %s222
      %p226 = pneg %p220
      %p227 = scmp.eq.s32.totalorder %s26, 3
      %p228 = por %p226, %p227
      %p229 = scmp.ne.s32.totalorder %s221, %s224
      %p230 = scmp.eq.s32.totalorder %s26, 0
      %p231 = por %p229, %p230
      %p232 = scmp.ne.s32.totalorder %s221, %s224
      %p233 = scmp.eq.s32.totalorder %s31, 3
      %p234 = por %p232, %p233
      %p235 = scmp.ne.s32.totalorder %s224, %s225
      %p236 = scmp.eq.s32.totalorder %s31, 0
      %p237 = por %p235, %p236
      %p238 = scmp.ne.s32.totalorder %s224, %s225
      %p239 = scmp.eq.s32.totalorder %s32, 3
      %p240 = por %p238, %p239
      %p242 = scmp.ne.s32.totalorder %s225, %s241
      %p243 = scmp.eq.s32.totalorder %s32, 0
      %p244 = por %p242, %p243
      %s245 = ssub.s32 %s33, %s45
      %s246 = ssub.s32 %s34, %s41
      %s247 = sor.u32 %s245, %s246
      %p248 = scmp.eq.s32.totalorder %s247, 0
      %s250 = sadd.s32 %s249, 1
      %s251 = scalar_select %p248, %s249, %s250
      %p254 = pneg %p248
      %p255 = scmp.eq.s32.totalorder %s26, 3
      %p256 = por %p254, %p255
      %p257 = scmp.ne.s32.totalorder %s249, %s252
      %p258 = scmp.eq.s32.totalorder %s26, 0
      %p259 = por %p257, %p258
      %p260 = scmp.ne.s32.totalorder %s249, %s252
      %p261 = scmp.eq.s32.totalorder %s31, 3
      %p262 = por %p260, %p261
      %p263 = scmp.ne.s32.totalorder %s252, %s253
      %p264 = scmp.eq.s32.totalorder %s31, 0
      %p265 = por %p263, %p264
      %p266 = scmp.ne.s32.totalorder %s252, %s253
      %p267 = scmp.eq.s32.totalorder %s32, 3
      %p268 = por %p266, %p267
      %p270 = scmp.ne.s32.totalorder %s253, %s269
      %p271 = scmp.eq.s32.totalorder %s32, 0
      %p272 = por %p270, %p271
      %p273 = scmp.le.s32.totalorder 1, %s26
      %p274 = scmp.lt.s32.totalorder %s26, 5
      %p275 = pnand %p273, %p274
      %p276 = pneg %p275
      // Predicated region
      $region9: #{tpu_custom_call.1} parent=5 // pred_check
        _
      $region10: #{tpu_custom_call.1} parent=5 // pred_check_branch
        %278 = sbr.rel (%p275) target = $region12
      $region11: #{tpu_custom_call.1} parent=5 // pred_region
        %s279 = ssub.s32 %s26, 1
        // Predicated region
        $region13: #{tpu_custom_call.1} parent=11 // pred_check
          %p280 = pneg %p87
        $region14: #{tpu_custom_call.1} parent=11 // pred_check_branch
          %282 = sbr.rel (%p280) target = $region16
        $region15: #{tpu_custom_call.1} parent=11 // pred_region
          %s284 = ssub.s32 8192, 8192
          %285 = vsyncadd [#allocation6], %s284
          %s286 = sshll.u32 [#allocation5], 4
          %s287 = int_to_ptr.vmem [resolvable:$true] %s286
          %292 = dma.hbm_to_vmem [thread:$0]  %s1, 8192, %s287, [#allocation6], 256, 256, 16
        $region16: #{tpu_custom_call.1} parent=11 // pred_fallthru
          _
        // Predicated region
        $region17: #{tpu_custom_call.1} parent=11 // pred_check
          %p293 = pneg %p108
        $region18: #{tpu_custom_call.1} parent=11 // pred_check_branch
          %295 = sbr.rel (%p293) target = $region20
        $region19: #{tpu_custom_call.1} parent=11 // pred_region
          %s297 = ssub.s32 8192, 8192
          %298 = vsyncadd [#allocation6], %s297
          %s299 = sshll.u32 [#allocation7], 4
          %s300 = int_to_ptr.vmem [resolvable:$true] %s299
          %305 = dma.hbm_to_vmem [thread:$0]  %s2, 8192, %s300, [#allocation6], 256, 256, 16
        $region20: #{tpu_custom_call.1} parent=11 // pred_fallthru
          _
        // Predicated region
        $region21: #{tpu_custom_call.1} parent=11 // pred_check
          %p306 = pneg %p129
        $region22: #{tpu_custom_call.1} parent=11 // pred_check_branch
          %308 = sbr.rel (%p306) target = $region24
        $region23: #{tpu_custom_call.1} parent=11 // pred_region
          %s310 = ssub.s32 4096, 4096
          %311 = vsyncadd [#allocation9], %s310
          %s312 = sshll.u32 [#allocation8], 4
          %s313 = int_to_ptr.vmem [resolvable:$true] %s312
          %318 = dma.hbm_to_vmem [thread:$0]  %s3, 4096, %s313, [#allocation9], 128, 128, 8
        $region24: #{tpu_custom_call.1} parent=11 // pred_fallthru
          _
      $region12: #{tpu_custom_call.1} parent=5 // pred_fallthru
        _
      %p319 = scmp.lt.s32.totalorder %s26, 4
      // Predicated region
      $region25: #{tpu_custom_call.1} parent=5 // pred_check
        %p320 = pneg %p319
      $region26: #{tpu_custom_call.1} parent=5 // pred_check_branch
        %322 = sbr.rel (%p320) target = $region28
      $region27: #{tpu_custom_call.1} parent=5 // pred_region
        // Predicated region
        $region29: #{tpu_custom_call.1} parent=27 // pred_check
          %p323 = pneg %p60
        $region30: #{tpu_custom_call.1} parent=27 // pred_check_branch
          %325 = sbr.rel (%p323) target = $region32
        $region31: #{tpu_custom_call.1} parent=27 // pred_region
          %s326 = sand.u32 %s26, 1
          %s327 = scalar_lea.sflag [#allocation3], %s326
          %s328 = sand.u32 %s50, 1
          %s329 = smul.addr %s328, 128
          %s330 = scalar_lea.vmem [#allocation2], %s329
          %s331 = smul.u32 16, %s34
          %s333 = ssub.s32 2048, 2048
          %334 = vsyncadd %s327, %s333
          %s335 = smul.addr %s331, 2
          %s336 = smul.addr %s33, 64
          %s337 = sadd.s32 %s335, %s336
          %s338 = smul.addr %s337, 64
          %s339 = scalar_lea.hbm %s0, %s338
          %s340 = sshll.u32 %s330, 4
          %s341 = int_to_ptr.vmem [resolvable:$true] %s340
          %346 = dma.hbm_to_vmem [thread:$0]  %s339, 2048, %s341, %s327, 128, 128, 8
        $region32: #{tpu_custom_call.1} parent=27 // pred_fallthru
          _
        // Predicated region
        $region33: #{tpu_custom_call.1} parent=27 // pred_check
          %p347 = pneg %p149
        $region34: #{tpu_custom_call.1} parent=27 // pred_check_branch
          %349 = sbr.rel (%p347) target = $region36
        $region35: #{tpu_custom_call.1} parent=27 // pred_region
          %s350 = sand.u32 %s26, 1
          %s351 = scalar_lea.sflag [#allocation3], %s350
          %s352 = sand.u32 %s139, 1
          %s353 = smul.addr %s352, 128
          %s354 = scalar_lea.vmem [#allocation10], %s353
          %s355 = smul.u32 16, %s34
          %s357 = ssub.s32 2048, 2048
          %358 = vsyncadd %s351, %s357
          %s359 = smul.addr %s355, 128
          %s360 = scalar_lea.hbm %s4, %s359
          %s361 = sshll.u32 %s354, 4
          %s362 = int_to_ptr.vmem [resolvable:$true] %s361
          %367 = dma.hbm_to_vmem [thread:$0]  %s360, 2048, %s362, %s351, 128, 128, 8
        $region36: #{tpu_custom_call.1} parent=27 // pred_fallthru
          _
        // Predicated region
        $region37: #{tpu_custom_call.1} parent=27 // pred_check
          %p368 = pneg %p175
        $region38: #{tpu_custom_call.1} parent=27 // pred_check_branch
          %370 = sbr.rel (%p368) target = $region40
        $region39: #{tpu_custom_call.1} parent=27 // pred_region
          %s371 = sand.u32 %s26, 1
          %s372 = scalar_lea.sflag [#allocation3], %s371
          %s373 = sand.u32 %s165, 1
          %s374 = smul.addr %s373, 128
          %s375 = scalar_lea.vmem [#allocation11], %s374
          %s376 = smul.u32 16, %s34
          %s378 = ssub.s32 2048, 2048
          %379 = vsyncadd %s372, %s378
          %s380 = smul.addr %s376, 128
          %s381 = scalar_lea.hbm %s5, %s380
          %s382 = sshll.u32 %s375, 4
          %s383 = int_to_ptr.vmem [resolvable:$true] %s382
          %388 = dma.hbm_to_vmem [thread:$0]  %s381, 2048, %s383, %s372, 128, 128, 8
        $region40: #{tpu_custom_call.1} parent=27 // pred_fallthru
          _
      $region28: #{tpu_custom_call.1} parent=5 // pred_fallthru
        _
      %p389 = scmp.le.s32.totalorder 1, %s26
      %p390 = scmp.lt.s32.totalorder %s26, 5
      %p391 = pnand %p389, %p390
      %p392 = pneg %p391
      // Predicated region
      $region41: #{tpu_custom_call.1} parent=5 // pred_check
        _
      $region42: #{tpu_custom_call.1} parent=5 // pred_check_branch
        %394 = sbr.rel (%p391) target = $region44
      $region43: #{tpu_custom_call.1} parent=5 // pred_region
        %s395 = ssub.s32 %s26, 1
        %s396 = sand.u32 %s31, 1
        %s397 = scalar_lea.sflag [#allocation3], %s396
        %s398 = sand.u32 %s53, 1
        %s399 = smul.addr %s398, 128
        %s400 = scalar_lea.vmem [#allocation2], %s399
        // Predicated region
        $region45: #{tpu_custom_call.1} parent=43 // pred_check
          %p401 = pneg %p66
        $region46: #{tpu_custom_call.1} parent=43 // pred_check_branch
          %403 = sbr.rel (%p401) target = $region48
        $region47: #{tpu_custom_call.1} parent=43 // pred_region
          %404 = dma.done %s397, 2048
        $region48: #{tpu_custom_call.1} parent=43 // pred_fallthru
          _
        // Predicated region
        $region49: #{tpu_custom_call.1} parent=43 // pred_check
          %p405 = pneg %p87
        $region50: #{tpu_custom_call.1} parent=43 // pred_check_branch
          %407 = sbr.rel (%p405) target = $region52
        $region51: #{tpu_custom_call.1} parent=43 // pred_region
          %408 = dma.done [#allocation6], 8192
        $region52: #{tpu_custom_call.1} parent=43 // pred_fallthru
          _
        // Predicated region
        $region53: #{tpu_custom_call.1} parent=43 // pred_check
          %p409 = pneg %p108
        $region54: #{tpu_custom_call.1} parent=43 // pred_check_branch
          %411 = sbr.rel (%p409) target = $region56
        $region55: #{tpu_custom_call.1} parent=43 // pred_region
          %412 = dma.done [#allocation6], 8192
        $region56: #{tpu_custom_call.1} parent=43 // pred_fallthru
          _
        // Predicated region
        $region57: #{tpu_custom_call.1} parent=43 // pred_check
          %p413 = pneg %p129
        $region58: #{tpu_custom_call.1} parent=43 // pred_check_branch
          %415 = sbr.rel (%p413) target = $region60
        $region59: #{tpu_custom_call.1} parent=43 // pred_region
          %416 = dma.done [#allocation9], 4096
        $region60: #{tpu_custom_call.1} parent=43 // pred_fallthru
          _
        %s417 = sand.u32 %s31, 1
        %s418 = scalar_lea.sflag [#allocation3], %s417
        %s419 = sand.u32 %s142, 1
        %s420 = smul.addr %s419, 128
        %s421 = scalar_lea.vmem [#allocation10], %s420
        // Predicated region
        $region61: #{tpu_custom_call.1} parent=43 // pred_check
          %p422 = pneg %p155
        $region62: #{tpu_custom_call.1} parent=43 // pred_check_branch
          %424 = sbr.rel (%p422) target = $region64
        $region63: #{tpu_custom_call.1} parent=43 // pred_region
          %425 = dma.done %s418, 2048
        $region64: #{tpu_custom_call.1} parent=43 // pred_fallthru
          _
        %s426 = sand.u32 %s31, 1
        %s427 = scalar_lea.sflag [#allocation3], %s426
        %s428 = sand.u32 %s168, 1
        %s429 = smul.addr %s428, 128
        %s430 = scalar_lea.vmem [#allocation11], %s429
        // Predicated region
        $region65: #{tpu_custom_call.1} parent=43 // pred_check
          %p431 = pneg %p181
        $region66: #{tpu_custom_call.1} parent=43 // pred_check_branch
          %433 = sbr.rel (%p431) target = $region68
        $region67: #{tpu_custom_call.1} parent=43 // pred_region
          %434 = dma.done %s427, 2048
        $region68: #{tpu_custom_call.1} parent=43 // pred_fallthru
          _
        %s435 = sand.u32 %s31, 1
        %s436 = scalar_lea.sflag [#allocation3], %s435
        %s437 = sand.u32 %s53, 1
        %s438 = smul.addr %s437, 128
        %s439 = scalar_lea.vmem [#allocation2], %s438
        %p440 = pneg %p66
        %p441 = pneg %p63
        %p442 = pneg %p87
        %p443 = pneg %p84
        %p444 = pneg %p108
        %p445 = pneg %p105
        %p446 = pneg %p129
        %p447 = pneg %p126
        %s448 = sand.u32 %s31, 1
        %s449 = scalar_lea.sflag [#allocation3], %s448
        %s450 = sand.u32 %s142, 1
        %s451 = smul.addr %s450, 128
        %s452 = scalar_lea.vmem [#allocation10], %s451
        %p453 = pneg %p155
        %p454 = pneg %p152
        %s455 = sand.u32 %s31, 1
        %s456 = scalar_lea.sflag [#allocation3], %s455
        %s457 = sand.u32 %s168, 1
        %s458 = smul.addr %s457, 128
        %s459 = scalar_lea.vmem [#allocation11], %s458
        %p460 = pneg %p181
        %p461 = pneg %p178
        %p462 = pneg %p209
        %p463 = pneg %p206
        %s464 = sand.u32 %s196, 1
        %s465 = scalar_lea.sflag [#allocation4], %s464
        %s466 = sand.u32 %s196, 1
        %s467 = smul.addr %s466, 128
        %s468 = scalar_lea.vmem [#allocation12], %s467
        %p469 = pneg %p237
        %p470 = pneg %p234
        %s471 = sand.u32 %s31, 1
        %s472 = scalar_lea.sflag [#allocation14], %s471
        %s473 = sand.u32 %s224, 1
        %s474 = smul.addr %s473, 128
        %s475 = scalar_lea.vmem [#allocation13], %s474
        %p476 = pneg %p265
        %p477 = pneg %p262
        %s478 = sand.u32 %s31, 1
        %s479 = scalar_lea.sflag [#allocation14], %s478
        %s480 = sand.u32 %s252, 1
        %s481 = smul.addr %s480, 128
        %s482 = scalar_lea.vmem [#allocation15], %s481
        %s483 = smul.u32 16, %s36
        %s484 = smul.u32 16, %s36
        %s485 = smul.u32 16, %s36
        %s486 = smul.u32 16, %s36
        %s487 = smul.u32 16, %s36
        %s488 = smul.u32 16, %s36
        %v489 = vld [vmem:[%s400] sm:$0xff]
        %v490 = vld [vmem:[%s400 + $0x8] sm:$0xff]
        %v491 = vld [vmem:[%s400 + $0x10] sm:$0xff]
        %v492 = vld [vmem:[%s400 + $0x18] sm:$0xff]
        %v493 = vld [vmem:[%s400 + $0x20] sm:$0xff]
        %v494 = vld [vmem:[%s400 + $0x28] sm:$0xff]
        %v495 = vld [vmem:[%s400 + $0x30] sm:$0xff]
        %v496 = vld [vmem:[%s400 + $0x38] sm:$0xff]
        %v497 = vld [vmem:[%s400 + $0x40] sm:$0xff]
        %v498 = vld [vmem:[%s400 + $0x48] sm:$0xff]
        %v499 = vld [vmem:[%s400 + $0x50] sm:$0xff]
        %v500 = vld [vmem:[%s400 + $0x58] sm:$0xff]
        %v501 = vld [vmem:[%s400 + $0x60] sm:$0xff]
        %v502 = vld [vmem:[%s400 + $0x68] sm:$0xff]
        %v503 = vld [vmem:[%s400 + $0x70] sm:$0xff]
        %v504 = vld [vmem:[%s400 + $0x78] sm:$0xff]
        %v505 = vld [vmem:[%s421] sm:$0xff]
        %v506 = vld [vmem:[%s421 + $0x8] sm:$0xff]
        %v507 = vld [vmem:[%s421 + $0x10] sm:$0xff]
        %v508 = vld [vmem:[%s421 + $0x18] sm:$0xff]
        %v509 = vld [vmem:[%s421 + $0x20] sm:$0xff]
        %v510 = vld [vmem:[%s421 + $0x28] sm:$0xff]
        %v511 = vld [vmem:[%s421 + $0x30] sm:$0xff]
        %v512 = vld [vmem:[%s421 + $0x38] sm:$0xff]
        %v513 = vld [vmem:[%s421 + $0x40] sm:$0xff]
        %v514 = vld [vmem:[%s421 + $0x48] sm:$0xff]
        %v515 = vld [vmem:[%s421 + $0x50] sm:$0xff]
        %v516 = vld [vmem:[%s421 + $0x58] sm:$0xff]
        %v517 = vld [vmem:[%s421 + $0x60] sm:$0xff]
        %v518 = vld [vmem:[%s421 + $0x68] sm:$0xff]
        %v519 = vld [vmem:[%s421 + $0x70] sm:$0xff]
        %v520 = vld [vmem:[%s421 + $0x78] sm:$0xff]
        %v521 = vld [vmem:[%s430] sm:$0xff]
        %v522 = vld [vmem:[%s430 + $0x8] sm:$0xff]
        %v523 = vld [vmem:[%s430 + $0x10] sm:$0xff]
        %v524 = vld [vmem:[%s430 + $0x18] sm:$0xff]
        %v525 = vld [vmem:[%s430 + $0x20] sm:$0xff]
        %v526 = vld [vmem:[%s430 + $0x28] sm:$0xff]
        %v527 = vld [vmem:[%s430 + $0x30] sm:$0xff]
        %v528 = vld [vmem:[%s430 + $0x38] sm:$0xff]
        %v529 = vld [vmem:[%s430 + $0x40] sm:$0xff]
        %v530 = vld [vmem:[%s430 + $0x48] sm:$0xff]
        %v531 = vld [vmem:[%s430 + $0x50] sm:$0xff]
        %v532 = vld [vmem:[%s430 + $0x58] sm:$0xff]
        %v533 = vld [vmem:[%s430 + $0x60] sm:$0xff]
        %v534 = vld [vmem:[%s430 + $0x68] sm:$0xff]
        %v535 = vld [vmem:[%s430 + $0x70] sm:$0xff]
        %v536 = vld [vmem:[%s430 + $0x78] sm:$0xff]
        %v537 = vld [vmem:[#allocation5] sm:$0xff]
        %v538 = vld [vmem:[#allocation5 + $0x8] sm:$0xff]
        %v539 = vld [vmem:[#allocation5 + $0x10] sm:$0xff]
        %v540 = vld [vmem:[#allocation5 + $0x18] sm:$0xff]
        %v541 = vld [vmem:[#allocation5 + $0x20] sm:$0xff]
        %v542 = vld [vmem:[#allocation5 + $0x28] sm:$0xff]
        %v543 = vld [vmem:[#allocation5 + $0x30] sm:$0xff]
        %v544 = vld [vmem:[#allocation5 + $0x38] sm:$0xff]
        %v545 = vld [vmem:[#allocation5 + $0x40] sm:$0xff]
        %v546 = vld [vmem:[#allocation5 + $0x48] sm:$0xff]
        %v547 = vld [vmem:[#allocation5 + $0x50] sm:$0xff]
        %v548 = vld [vmem:[#allocation5 + $0x58] sm:$0xff]
        %v549 = vld [vmem:[#allocation5 + $0x60] sm:$0xff]
        %v550 = vld [vmem:[#allocation5 + $0x68] sm:$0xff]
        %v551 = vld [vmem:[#allocation5 + $0x70] sm:$0xff]
        %v552 = vld [vmem:[#allocation5 + $0x78] sm:$0xff]
        %v553 = vld [vmem:[#allocation5 + $0x80] sm:$0xff]
        %v554 = vld [vmem:[#allocation5 + $0x88] sm:$0xff]
        %v555 = vld [vmem:[#allocation5 + $0x90] sm:$0xff]
        %v556 = vld [vmem:[#allocation5 + $0x98] sm:$0xff]
        %v557 = vld [vmem:[#allocation5 + $0xa0] sm:$0xff]
        %v558 = vld [vmem:[#allocation5 + $0xa8] sm:$0xff]
        %v559 = vld [vmem:[#allocation5 + $0xb0] sm:$0xff]
        %v560 = vld [vmem:[#allocation5 + $0xb8] sm:$0xff]
        %v561 = vld [vmem:[#allocation5 + $0xc0] sm:$0xff]
        %v562 = vld [vmem:[#allocation5 + $0xc8] sm:$0xff]
        %v563 = vld [vmem:[#allocation5 + $0xd0] sm:$0xff]
        %v564 = vld [vmem:[#allocation5 + $0xd8] sm:$0xff]
        %v565 = vld [vmem:[#allocation5 + $0xe0] sm:$0xff]
        %v566 = vld [vmem:[#allocation5 + $0xe8] sm:$0xff]
        %v567 = vld [vmem:[#allocation5 + $0xf0] sm:$0xff]
        %v568 = vld [vmem:[#allocation5 + $0xf8] sm:$0xff]
        %v569 = vld [vmem:[#allocation5 + $0x100] sm:$0xff]
        %v570 = vld [vmem:[#allocation5 + $0x108] sm:$0xff]
        %v571 = vld [vmem:[#allocation5 + $0x110] sm:$0xff]
        %v572 = vld [vmem:[#allocation5 + $0x118] sm:$0xff]
        %v573 = vld [vmem:[#allocation5 + $0x120] sm:$0xff]
        %v574 = vld [vmem:[#allocation5 + $0x128] sm:$0xff]
        %v575 = vld [vmem:[#allocation5 + $0x130] sm:$0xff]
        %v576 = vld [vmem:[#allocation5 + $0x138] sm:$0xff]
        %v577 = vld [vmem:[#allocation5 + $0x140] sm:$0xff]
        %v578 = vld [vmem:[#allocation5 + $0x148] sm:$0xff]
        %v579 = vld [vmem:[#allocation5 + $0x150] sm:$0xff]
        %v580 = vld [vmem:[#allocation5 + $0x158] sm:$0xff]
        %v581 = vld [vmem:[#allocation5 + $0x160] sm:$0xff]
        %v582 = vld [vmem:[#allocation5 + $0x168] sm:$0xff]
        %v583 = vld [vmem:[#allocation5 + $0x170] sm:$0xff]
        %v584 = vld [vmem:[#allocation5 + $0x178] sm:$0xff]
        %v585 = vld [vmem:[#allocation5 + $0x180] sm:$0xff]
        %v586 = vld [vmem:[#allocation5 + $0x188] sm:$0xff]
        %v587 = vld [vmem:[#allocation5 + $0x190] sm:$0xff]
        %v588 = vld [vmem:[#allocation5 + $0x198] sm:$0xff]
        %v589 = vld [vmem:[#allocation5 + $0x1a0] sm:$0xff]
        %v590 = vld [vmem:[#allocation5 + $0x1a8] sm:$0xff]
        %v591 = vld [vmem:[#allocation5 + $0x1b0] sm:$0xff]
        %v592 = vld [vmem:[#allocation5 + $0x1b8] sm:$0xff]
        %v593 = vld [vmem:[#allocation5 + $0x1c0] sm:$0xff]
        %v594 = vld [vmem:[#allocation5 + $0x1c8] sm:$0xff]
        %v595 = vld [vmem:[#allocation5 + $0x1d0] sm:$0xff]
        %v596 = vld [vmem:[#allocation5 + $0x1d8] sm:$0xff]
        %v597 = vld [vmem:[#allocation5 + $0x1e0] sm:$0xff]
        %v598 = vld [vmem:[#allocation5 + $0x1e8] sm:$0xff]
        %v599 = vld [vmem:[#allocation5 + $0x1f0] sm:$0xff]
        %v600 = vld [vmem:[#allocation5 + $0x1f8] sm:$0xff]
        %v617 = vunpack.c.l.b16 %v489
        %v618 = vunpack.c.h.b16 %v489
        %v619 = vunpack.c.l.b16 %v490
        %v620 = vunpack.c.h.b16 %v490
        %v621 = vunpack.c.l.b16 %v491
        %v622 = vunpack.c.h.b16 %v491
        %v623 = vunpack.c.l.b16 %v492
        %v624 = vunpack.c.h.b16 %v492
        %v625 = vunpack.c.l.b16 %v493
        %v626 = vunpack.c.h.b16 %v493
        %v627 = vunpack.c.l.b16 %v494
        %v628 = vunpack.c.h.b16 %v494
        %v629 = vunpack.c.l.b16 %v495
        %v630 = vunpack.c.h.b16 %v495
        %v631 = vunpack.c.l.b16 %v496
        %v632 = vunpack.c.h.b16 %v496
        %v633 = vunpack.c.l.b16 %v497
        %v634 = vunpack.c.h.b16 %v497
        %v635 = vunpack.c.l.b16 %v498
        %v636 = vunpack.c.h.b16 %v498
        %v637 = vunpack.c.l.b16 %v499
        %v638 = vunpack.c.h.b16 %v499
        %v639 = vunpack.c.l.b16 %v500
        %v640 = vunpack.c.h.b16 %v500
        %v641 = vunpack.c.l.b16 %v501
        %v642 = vunpack.c.h.b16 %v501
        %v643 = vunpack.c.l.b16 %v502
        %v644 = vunpack.c.h.b16 %v502
        %v645 = vunpack.c.l.b16 %v503
        %v646 = vunpack.c.h.b16 %v503
        %v647 = vunpack.c.l.b16 %v504
        %v648 = vunpack.c.h.b16 %v504
        %v649 = vpack.c.b16 %v619, %v617
        %v650 = vpack.c.b16 %v620, %v618
        %v651 = vpack.c.b16 %v623, %v621
        %v652 = vpack.c.b16 %v624, %v622
        %v653 = vpack.c.b16 %v627, %v625
        %v654 = vpack.c.b16 %v628, %v626
        %v655 = vpack.c.b16 %v631, %v629
        %v656 = vpack.c.b16 %v632, %v630
        %v657 = vpack.c.b16 %v635, %v633
        %v658 = vpack.c.b16 %v636, %v634
        %v659 = vpack.c.b16 %v639, %v637
        %v660 = vpack.c.b16 %v640, %v638
        %v661 = vpack.c.b16 %v643, %v641
        %v662 = vpack.c.b16 %v644, %v642
        %v663 = vpack.c.b16 %v647, %v645
        %v664 = vpack.c.b16 %v648, %v646
        %v745 = vunpack.c.l.b16 %v537
        %v746 = vunpack.c.h.b16 %v537
        %v747 = vunpack.c.l.b16 %v538
        %v748 = vunpack.c.h.b16 %v538
        %v749 = vunpack.c.l.b16 %v539
        %v750 = vunpack.c.h.b16 %v539
        %v751 = vunpack.c.l.b16 %v540
        %v752 = vunpack.c.h.b16 %v540
        %v753 = vunpack.c.l.b16 %v541
        %v754 = vunpack.c.h.b16 %v541
        %v755 = vunpack.c.l.b16 %v542
        %v756 = vunpack.c.h.b16 %v542
        %v757 = vunpack.c.l.b16 %v543
        %v758 = vunpack.c.h.b16 %v543
        %v759 = vunpack.c.l.b16 %v544
        %v760 = vunpack.c.h.b16 %v544
        %v761 = vunpack.c.l.b16 %v545
        %v762 = vunpack.c.h.b16 %v545
        %v763 = vunpack.c.l.b16 %v546
        %v764 = vunpack.c.h.b16 %v546
        %v765 = vunpack.c.l.b16 %v547
        %v766 = vunpack.c.h.b16 %v547
        %v767 = vunpack.c.l.b16 %v548
        %v768 = vunpack.c.h.b16 %v548
        %v769 = vunpack.c.l.b16 %v549
        %v770 = vunpack.c.h.b16 %v549
        %v771 = vunpack.c.l.b16 %v550
        %v772 = vunpack.c.h.b16 %v550
        %v773 = vunpack.c.l.b16 %v551
        %v774 = vunpack.c.h.b16 %v551
        %v775 = vunpack.c.l.b16 %v552
        %v776 = vunpack.c.h.b16 %v552
        %v777 = vunpack.c.l.b16 %v553
        %v778 = vunpack.c.h.b16 %v553
        %v779 = vunpack.c.l.b16 %v554
        %v780 = vunpack.c.h.b16 %v554
        %v781 = vunpack.c.l.b16 %v555
        %v782 = vunpack.c.h.b16 %v555
        %v783 = vunpack.c.l.b16 %v556
        %v784 = vunpack.c.h.b16 %v556
        %v785 = vunpack.c.l.b16 %v557
        %v786 = vunpack.c.h.b16 %v557
        %v787 = vunpack.c.l.b16 %v558
        %v788 = vunpack.c.h.b16 %v558
        %v789 = vunpack.c.l.b16 %v559
        %v790 = vunpack.c.h.b16 %v559
        %v791 = vunpack.c.l.b16 %v560
        %v792 = vunpack.c.h.b16 %v560
        %v793 = vunpack.c.l.b16 %v561
        %v794 = vunpack.c.h.b16 %v561
        %v795 = vunpack.c.l.b16 %v562
        %v796 = vunpack.c.h.b16 %v562
        %v797 = vunpack.c.l.b16 %v563
        %v798 = vunpack.c.h.b16 %v563
        %v799 = vunpack.c.l.b16 %v564
        %v800 = vunpack.c.h.b16 %v564
        %v801 = vunpack.c.l.b16 %v565
        %v802 = vunpack.c.h.b16 %v565
        %v803 = vunpack.c.l.b16 %v566
        %v804 = vunpack.c.h.b16 %v566
        %v805 = vunpack.c.l.b16 %v567
        %v806 = vunpack.c.h.b16 %v567
        %v807 = vunpack.c.l.b16 %v568
        %v808 = vunpack.c.h.b16 %v568
        %v809 = vunpack.c.l.b16 %v569
        %v810 = vunpack.c.h.b16 %v569
        %v811 = vunpack.c.l.b16 %v570
        %v812 = vunpack.c.h.b16 %v570
        %v813 = vunpack.c.l.b16 %v571
        %v814 = vunpack.c.h.b16 %v571
        %v815 = vunpack.c.l.b16 %v572
        %v816 = vunpack.c.h.b16 %v572
        %v817 = vunpack.c.l.b16 %v573
        %v818 = vunpack.c.h.b16 %v573
        %v819 = vunpack.c.l.b16 %v574
        %v820 = vunpack.c.h.b16 %v574
        %v821 = vunpack.c.l.b16 %v575
        %v822 = vunpack.c.h.b16 %v575
        %v823 = vunpack.c.l.b16 %v576
        %v824 = vunpack.c.h.b16 %v576
        %v825 = vunpack.c.l.b16 %v577
        %v826 = vunpack.c.h.b16 %v577
        %v827 = vunpack.c.l.b16 %v578
        %v828 = vunpack.c.h.b16 %v578
        %v829 = vunpack.c.l.b16 %v579
        %v830 = vunpack.c.h.b16 %v579
        %v831 = vunpack.c.l.b16 %v580
        %v832 = vunpack.c.h.b16 %v580
        %v833 = vunpack.c.l.b16 %v581
        %v834 = vunpack.c.h.b16 %v581
        %v835 = vunpack.c.l.b16 %v582
        %v836 = vunpack.c.h.b16 %v582
        %v837 = vunpack.c.l.b16 %v583
        %v838 = vunpack.c.h.b16 %v583
        %v839 = vunpack.c.l.b16 %v584
        %v840 = vunpack.c.h.b16 %v584
        %v841 = vunpack.c.l.b16 %v585
        %v842 = vunpack.c.h.b16 %v585
        %v843 = vunpack.c.l.b16 %v586
        %v844 = vunpack.c.h.b16 %v586
        %v845 = vunpack.c.l.b16 %v587
        %v846 = vunpack.c.h.b16 %v587
        %v847 = vunpack.c.l.b16 %v588
        %v848 = vunpack.c.h.b16 %v588
        %v849 = vunpack.c.l.b16 %v589
        %v850 = vunpack.c.h.b16 %v589
        %v851 = vunpack.c.l.b16 %v590
        %v852 = vunpack.c.h.b16 %v590
        %v853 = vunpack.c.l.b16 %v591
        %v854 = vunpack.c.h.b16 %v591
        %v855 = vunpack.c.l.b16 %v592
        %v856 = vunpack.c.h.b16 %v592
        %v857 = vunpack.c.l.b16 %v593
        %v858 = vunpack.c.h.b16 %v593
        %v859 = vunpack.c.l.b16 %v594
        %v860 = vunpack.c.h.b16 %v594
        %v861 = vunpack.c.l.b16 %v595
        %v862 = vunpack.c.h.b16 %v595
        %v863 = vunpack.c.l.b16 %v596
        %v864 = vunpack.c.h.b16 %v596
        %v865 = vunpack.c.l.b16 %v597
        %v866 = vunpack.c.h.b16 %v597
        %v867 = vunpack.c.l.b16 %v598
        %v868 = vunpack.c.h.b16 %v598
        %v869 = vunpack.c.l.b16 %v599
        %v870 = vunpack.c.h.b16 %v599
        %v871 = vunpack.c.l.b16 %v600
        %v872 = vunpack.c.h.b16 %v600
        %v873 = vpack.c.b16 %v749, %v745
        %v874 = vpack.c.b16 %v750, %v746
        %v875 = vpack.c.b16 %v751, %v747
        %v876 = vpack.c.b16 %v752, %v748
        %v877 = vpack.c.b16 %v757, %v753
        %v878 = vpack.c.b16 %v758, %v754
        %v879 = vpack.c.b16 %v759, %v755
        %v880 = vpack.c.b16 %v760, %v756
        %v881 = vpack.c.b16 %v765, %v761
        %v882 = vpack.c.b16 %v766, %v762
        %v883 = vpack.c.b16 %v767, %v763
        %v884 = vpack.c.b16 %v768, %v764
        %v885 = vpack.c.b16 %v773, %v769
        %v886 = vpack.c.b16 %v774, %v770
        %v887 = vpack.c.b16 %v775, %v771
        %v888 = vpack.c.b16 %v776, %v772
        %v889 = vpack.c.b16 %v781, %v777
        %v890 = vpack.c.b16 %v782, %v778
        %v891 = vpack.c.b16 %v783, %v779
        %v892 = vpack.c.b16 %v784, %v780
        %v893 = vpack.c.b16 %v789, %v785
        %v894 = vpack.c.b16 %v790, %v786
        %v895 = vpack.c.b16 %v791, %v787
        %v896 = vpack.c.b16 %v792, %v788
        %v897 = vpack.c.b16 %v797, %v793
        %v898 = vpack.c.b16 %v798, %v794
        %v899 = vpack.c.b16 %v799, %v795
        %v900 = vpack.c.b16 %v800, %v796
        %v901 = vpack.c.b16 %v805, %v801
        %v902 = vpack.c.b16 %v806, %v802
        %v903 = vpack.c.b16 %v807, %v803
        %v904 = vpack.c.b16 %v808, %v804
        %v905 = vpack.c.b16 %v813, %v809
        %v906 = vpack.c.b16 %v814, %v810
        %v907 = vpack.c.b16 %v815, %v811
        %v908 = vpack.c.b16 %v816, %v812
        %v909 = vpack.c.b16 %v821, %v817
        %v910 = vpack.c.b16 %v822, %v818
        %v911 = vpack.c.b16 %v823, %v819
        %v912 = vpack.c.b16 %v824, %v820
        %v913 = vpack.c.b16 %v829, %v825
        %v914 = vpack.c.b16 %v830, %v826
        %v915 = vpack.c.b16 %v831, %v827
        %v916 = vpack.c.b16 %v832, %v828
        %v917 = vpack.c.b16 %v837, %v833
        %v918 = vpack.c.b16 %v838, %v834
        %v919 = vpack.c.b16 %v839, %v835
        %v920 = vpack.c.b16 %v840, %v836
        %v921 = vpack.c.b16 %v845, %v841
        %v922 = vpack.c.b16 %v846, %v842
        %v923 = vpack.c.b16 %v847, %v843
        %v924 = vpack.c.b16 %v848, %v844
        %v925 = vpack.c.b16 %v853, %v849
        %v926 = vpack.c.b16 %v854, %v850
        %v927 = vpack.c.b16 %v855, %v851
        %v928 = vpack.c.b16 %v856, %v852
        %v929 = vpack.c.b16 %v861, %v857
        %v930 = vpack.c.b16 %v862, %v858
        %v931 = vpack.c.b16 %v863, %v859
        %v932 = vpack.c.b16 %v864, %v860
        %v933 = vpack.c.b16 %v869, %v865
        %v934 = vpack.c.b16 %v870, %v866
        %v935 = vpack.c.b16 %v871, %v867
        %v936 = vpack.c.b16 %v872, %v868
        %1001 = vmatprep.subr.bf16.mxu0 %v902
        %1002 = vmatpush1.bf16.msra.mxu0 %v901
        %1003 = vmatprep.subr.bf16.mxu0 %v898
        %1004 = vmatpush1.bf16.msra.mxu0 %v897
        %1005 = vmatprep.subr.bf16.mxu0 %v894
        %1006 = vmatpush1.bf16.msra.mxu0 %v893
        %1007 = vmatprep.subr.bf16.mxu0 %v890
        %1008 = vmatpush1.bf16.msra.mxu0 %v889
        %1009 = vmatprep.subr.bf16.mxu0 %v886
        %1010 = vmatpush1.bf16.msra.mxu0 %v885
        %1011 = vmatprep.subr.bf16.mxu0 %v882
        %1012 = vmatpush1.bf16.msra.mxu0 %v881
        %1013 = vmatprep.subr.bf16.mxu0 %v878
        %1014 = vmatpush1.bf16.msra.mxu0 %v877
        %1015 = vmatprep.subr.bf16.mxu0 %v874
        %1016 = vmatpush1.bf16.msra.mxu0 %v873
        %1017 = vmatprep.subr.bf16.mxu0 %v934
        %1018 = vmatpush2.bf16.msra.mxu0 %v933
        %1019 = vmatprep.subr.bf16.mxu0 %v930
        %1020 = vmatpush2.bf16.msra.mxu0 %v929
        %1021 = vmatprep.subr.bf16.mxu0 %v926
        %1022 = vmatpush2.bf16.msra.mxu0 %v925
        %1023 = vmatprep.subr.bf16.mxu0 %v922
        %1024 = vmatpush2.bf16.msra.mxu0 %v921
        %1025 = vmatprep.subr.bf16.mxu0 %v918
        %1026 = vmatpush2.bf16.msra.mxu0 %v917
        %1027 = vmatprep.subr.bf16.mxu0 %v914
        %1028 = vmatpush2.bf16.msra.mxu0 %v913
        %1029 = vmatprep.subr.bf16.mxu0 %v910
        %1030 = vmatpush2.bf16.msra.mxu0 %v909
        %1031 = vmatprep.subr.bf16.mxu0 %v906
        %1032 = vmatpush2.bf16.msra.mxu0 %v905
        %1033 = vmatprep.mubr.bf16.mxu0 %v650
        %1034 = vmatmul.mubr.bf16.gmra.mxu0 %v649
        %v1035 = vpop.f32.mrf.mxu0
        %v1036 = vadd.f32 0.0, %v1035
        %v1037 = vpop.f32.mrf.mxu0
        %v1038 = vadd.f32 0.0, %v1037
        %v1039 = vpop.f32.mrf.mxu0
        %v1040 = vadd.f32 0.0, %v1039
        %v1041 = vpop.f32.mrf.mxu0
        %v1042 = vadd.f32 0.0, %v1041
        %1043 = vmatprep.mubr.bf16.mxu0 %v652
        %1044 = vmatmul.mubr.bf16.gmra.mxu0 %v651
        %v1045 = vpop.f32.mrf.mxu0
        %v1046 = vadd.f32 0.0, %v1045
        %v1047 = vpop.f32.mrf.mxu0
        %v1048 = vadd.f32 0.0, %v1047
        %v1049 = vpop.f32.mrf.mxu0
        %v1050 = vadd.f32 0.0, %v1049
        %v1051 = vpop.f32.mrf.mxu0
        %v1052 = vadd.f32 0.0, %v1051
        %1053 = vmatprep.mubr.bf16.mxu0 %v654
        %1054 = vmatmul.mubr.bf16.gmra.mxu0 %v653
        %v1055 = vpop.f32.mrf.mxu0
        %v1056 = vadd.f32 0.0, %v1055
        %v1057 = vpop.f32.mrf.mxu0
        %v1058 = vadd.f32 0.0, %v1057
        %v1059 = vpop.f32.mrf.mxu0
        %v1060 = vadd.f32 0.0, %v1059
        %v1061 = vpop.f32.mrf.mxu0
        %v1062 = vadd.f32 0.0, %v1061
        %1063 = vmatprep.mubr.bf16.mxu0 %v656
        %1064 = vmatmul.mubr.bf16.gmra.mxu0 %v655
        %v1065 = vpop.f32.mrf.mxu0
        %v1066 = vadd.f32 0.0, %v1065
        %v1067 = vpop.f32.mrf.mxu0
        %v1068 = vadd.f32 0.0, %v1067
        %v1069 = vpop.f32.mrf.mxu0
        %v1070 = vadd.f32 0.0, %v1069
        %v1071 = vpop.f32.mrf.mxu0
        %v1072 = vadd.f32 0.0, %v1071
        %1073 = vmatprep.mubr.bf16.mxu0 %v658
        %1074 = vmatmul.mubr.bf16.gmra.mxu0 %v657
        %v1075 = vpop.f32.mrf.mxu0
        %v1076 = vadd.f32 0.0, %v1075
        %v1077 = vpop.f32.mrf.mxu0
        %v1078 = vadd.f32 0.0, %v1077
        %v1079 = vpop.f32.mrf.mxu0
        %v1080 = vadd.f32 0.0, %v1079
        %v1081 = vpop.f32.mrf.mxu0
        %v1082 = vadd.f32 0.0, %v1081
        %1083 = vmatprep.mubr.bf16.mxu0 %v660
        %1084 = vmatmul.mubr.bf16.gmra.mxu0 %v659
        %v1085 = vpop.f32.mrf.mxu0
        %v1086 = vadd.f32 0.0, %v1085
        %v1087 = vpop.f32.mrf.mxu0
        %v1088 = vadd.f32 0.0, %v1087
        %v1089 = vpop.f32.mrf.mxu0
        %v1090 = vadd.f32 0.0, %v1089
        %v1091 = vpop.f32.mrf.mxu0
        %v1092 = vadd.f32 0.0, %v1091
        %1093 = vmatprep.mubr.bf16.mxu0 %v662
        %1094 = vmatmul.mubr.bf16.gmra.mxu0 %v661
        %v1095 = vpop.f32.mrf.mxu0
        %v1096 = vadd.f32 0.0, %v1095
        %v1097 = vpop.f32.mrf.mxu0
        %v1098 = vadd.f32 0.0, %v1097
        %v1099 = vpop.f32.mrf.mxu0
        %v1100 = vadd.f32 0.0, %v1099
        %v1101 = vpop.f32.mrf.mxu0
        %v1102 = vadd.f32 0.0, %v1101
        %1103 = vmatprep.mubr.bf16.mxu0 %v664
        %1104 = vmatmul.mubr.bf16.gmra.mxu0 %v663
        %v1105 = vpop.f32.mrf.mxu0
        %v1106 = vadd.f32 0.0, %v1105
        %v1107 = vpop.f32.mrf.mxu0
        %v1108 = vadd.f32 0.0, %v1107
        %v1109 = vpop.f32.mrf.mxu0
        %v1110 = vadd.f32 0.0, %v1109
        %v1111 = vpop.f32.mrf.mxu0
        %v1112 = vadd.f32 0.0, %v1111
        %1113 = vdwg.mxu0
        %1114 = vmatprep.subr.bf16.mxu0 %v904
        %1115 = vmatpush1.bf16.msra.mxu0 %v903
        %1116 = vmatprep.subr.bf16.mxu0 %v900
        %1117 = vmatpush1.bf16.msra.mxu0 %v899
        %1118 = vmatprep.subr.bf16.mxu0 %v896
        %1119 = vmatpush1.bf16.msra.mxu0 %v895
        %1120 = vmatprep.subr.bf16.mxu0 %v892
        %1121 = vmatpush1.bf16.msra.mxu0 %v891
        %1122 = vmatprep.subr.bf16.mxu0 %v888
        %1123 = vmatpush1.bf16.msra.mxu0 %v887
        %1124 = vmatprep.subr.bf16.mxu0 %v884
        %1125 = vmatpush1.bf16.msra.mxu0 %v883
        %1126 = vmatprep.subr.bf16.mxu0 %v880
        %1127 = vmatpush1.bf16.msra.mxu0 %v879
        %1128 = vmatprep.subr.bf16.mxu0 %v876
        %1129 = vmatpush1.bf16.msra.mxu0 %v875
        %1130 = vmatprep.subr.bf16.mxu0 %v936
        %1131 = vmatpush2.bf16.msra.mxu0 %v935
        %1132 = vmatprep.subr.bf16.mxu0 %v932
        %1133 = vmatpush2.bf16.msra.mxu0 %v931
        %1134 = vmatprep.subr.bf16.mxu0 %v928
        %1135 = vmatpush2.bf16.msra.mxu0 %v927
        %1136 = vmatprep.subr.bf16.mxu0 %v924
        %1137 = vmatpush2.bf16.msra.mxu0 %v923
        %1138 = vmatprep.subr.bf16.mxu0 %v920
        %1139 = vmatpush2.bf16.msra.mxu0 %v919
        %1140 = vmatprep.subr.bf16.mxu0 %v916
        %1141 = vmatpush2.bf16.msra.mxu0 %v915
        %1142 = vmatprep.subr.bf16.mxu0 %v912
        %1143 = vmatpush2.bf16.msra.mxu0 %v911
        %1144 = vmatprep.subr.bf16.mxu0 %v908
        %1145 = vmatpush2.bf16.msra.mxu0 %v907
        %1146 = vmatprep.mubr.bf16.mxu0 %v650
        %1147 = vmatmul.mubr.bf16.gmra.mxu0 %v649
        %v1148 = vpop.f32.mrf.mxu0
        %v1149 = vadd.f32 0.0, %v1148
        %v1150 = vpop.f32.mrf.mxu0
        %v1151 = vadd.f32 0.0, %v1150
        %v1152 = vpop.f32.mrf.mxu0
        %v1153 = vadd.f32 0.0, %v1152
        %v1154 = vpop.f32.mrf.mxu0
        %v1155 = vadd.f32 0.0, %v1154
        %1156 = vmatprep.mubr.bf16.mxu0 %v652
        %1157 = vmatmul.mubr.bf16.gmra.mxu0 %v651
        %v1158 = vpop.f32.mrf.mxu0
        %v1159 = vadd.f32 0.0, %v1158
        %v1160 = vpop.f32.mrf.mxu0
        %v1161 = vadd.f32 0.0, %v1160
        %v1162 = vpop.f32.mrf.mxu0
        %v1163 = vadd.f32 0.0, %v1162
        %v1164 = vpop.f32.mrf.mxu0
        %v1165 = vadd.f32 0.0, %v1164
        %1166 = vmatprep.mubr.bf16.mxu0 %v654
        %1167 = vmatmul.mubr.bf16.gmra.mxu0 %v653
        %v1168 = vpop.f32.mrf.mxu0
        %v1169 = vadd.f32 0.0, %v1168
        %v1170 = vpop.f32.mrf.mxu0
        %v1171 = vadd.f32 0.0, %v1170
        %v1172 = vpop.f32.mrf.mxu0
        %v1173 = vadd.f32 0.0, %v1172
        %v1174 = vpop.f32.mrf.mxu0
        %v1175 = vadd.f32 0.0, %v1174
        %1176 = vmatprep.mubr.bf16.mxu0 %v656
        %1177 = vmatmul.mubr.bf16.gmra.mxu0 %v655
        %v1178 = vpop.f32.mrf.mxu0
        %v1179 = vadd.f32 0.0, %v1178
        %v1180 = vpop.f32.mrf.mxu0
        %v1181 = vadd.f32 0.0, %v1180
        %v1182 = vpop.f32.mrf.mxu0
        %v1183 = vadd.f32 0.0, %v1182
        %v1184 = vpop.f32.mrf.mxu0
        %v1185 = vadd.f32 0.0, %v1184
        %1186 = vmatprep.mubr.bf16.mxu0 %v658
        %1187 = vmatmul.mubr.bf16.gmra.mxu0 %v657
        %v1188 = vpop.f32.mrf.mxu0
        %v1189 = vadd.f32 0.0, %v1188
        %v1190 = vpop.f32.mrf.mxu0
        %v1191 = vadd.f32 0.0, %v1190
        %v1192 = vpop.f32.mrf.mxu0
        %v1193 = vadd.f32 0.0, %v1192
        %v1194 = vpop.f32.mrf.mxu0
        %v1195 = vadd.f32 0.0, %v1194
        %1196 = vmatprep.mubr.bf16.mxu0 %v660
        %1197 = vmatmul.mubr.bf16.gmra.mxu0 %v659
        %v1198 = vpop.f32.mrf.mxu0
        %v1199 = vadd.f32 0.0, %v1198
        %v1200 = vpop.f32.mrf.mxu0
        %v1201 = vadd.f32 0.0, %v1200
        %v1202 = vpop.f32.mrf.mxu0
        %v1203 = vadd.f32 0.0, %v1202
        %v1204 = vpop.f32.mrf.mxu0
        %v1205 = vadd.f32 0.0, %v1204
        %1206 = vmatprep.mubr.bf16.mxu0 %v662
        %1207 = vmatmul.mubr.bf16.gmra.mxu0 %v661
        %v1208 = vpop.f32.mrf.mxu0
        %v1209 = vadd.f32 0.0, %v1208
        %v1210 = vpop.f32.mrf.mxu0
        %v1211 = vadd.f32 0.0, %v1210
        %v1212 = vpop.f32.mrf.mxu0
        %v1213 = vadd.f32 0.0, %v1212
        %v1214 = vpop.f32.mrf.mxu0
        %v1215 = vadd.f32 0.0, %v1214
        %1216 = vmatprep.mubr.bf16.mxu0 %v664
        %1217 = vmatmul.mubr.bf16.gmra.mxu0 %v663
        %v1218 = vpop.f32.mrf.mxu0
        %v1219 = vadd.f32 0.0, %v1218
        %v1220 = vpop.f32.mrf.mxu0
        %v1221 = vadd.f32 0.0, %v1220
        %v1222 = vpop.f32.mrf.mxu0
        %v1223 = vadd.f32 0.0, %v1222
        %v1224 = vpop.f32.mrf.mxu0
        %v1225 = vadd.f32 0.0, %v1224
        %1226 = vdwg.mxu0
        %v1227 = vmul.f32 %v1036, %v505
        %v1228 = vmul.f32 %v1038, %v505
        %v1229 = vmul.f32 %v1040, %v506
        %v1230 = vmul.f32 %v1042, %v506
        %v1231 = vmul.f32 %v1046, %v507
        %v1232 = vmul.f32 %v1048, %v507
        %v1233 = vmul.f32 %v1050, %v508
        %v1234 = vmul.f32 %v1052, %v508
        %v1235 = vmul.f32 %v1056, %v509
        %v1236 = vmul.f32 %v1058, %v509
        %v1237 = vmul.f32 %v1060, %v510
        %v1238 = vmul.f32 %v1062, %v510
        %v1239 = vmul.f32 %v1066, %v511
        %v1240 = vmul.f32 %v1068, %v511
        %v1241 = vmul.f32 %v1070, %v512
        %v1242 = vmul.f32 %v1072, %v512
        %v1243 = vmul.f32 %v1076, %v513
        %v1244 = vmul.f32 %v1078, %v513
        %v1245 = vmul.f32 %v1080, %v514
        %v1246 = vmul.f32 %v1082, %v514
        %v1247 = vmul.f32 %v1086, %v515
        %v1248 = vmul.f32 %v1088, %v515
        %v1249 = vmul.f32 %v1090, %v516
        %v1250 = vmul.f32 %v1092, %v516
        %v1251 = vmul.f32 %v1096, %v517
        %v1252 = vmul.f32 %v1098, %v517
        %v1253 = vmul.f32 %v1100, %v518
        %v1254 = vmul.f32 %v1102, %v518
        %v1255 = vmul.f32 %v1106, %v519
        %v1256 = vmul.f32 %v1108, %v519
        %v1257 = vmul.f32 %v1110, %v520
        %v1258 = vmul.f32 %v1112, %v520
        %v1259 = vmul.f32 %v1149, %v521
        %v1260 = vmul.f32 %v1151, %v521
        %v1261 = vmul.f32 %v1153, %v522
        %v1262 = vmul.f32 %v1155, %v522
        %v1263 = vmul.f32 %v1159, %v523
        %v1264 = vmul.f32 %v1161, %v523
        %v1265 = vmul.f32 %v1163, %v524
        %v1266 = vmul.f32 %v1165, %v524
        %v1267 = vmul.f32 %v1169, %v525
        %v1268 = vmul.f32 %v1171, %v525
        %v1269 = vmul.f32 %v1173, %v526
        %v1270 = vmul.f32 %v1175, %v526
        %v1271 = vmul.f32 %v1179, %v527
        %v1272 = vmul.f32 %v1181, %v527
        %v1273 = vmul.f32 %v1183, %v528
        %v1274 = vmul.f32 %v1185, %v528
        %v1275 = vmul.f32 %v1189, %v529
        %v1276 = vmul.f32 %v1191, %v529
        %v1277 = vmul.f32 %v1193, %v530
        %v1278 = vmul.f32 %v1195, %v530
        %v1279 = vmul.f32 %v1199, %v531
        %v1280 = vmul.f32 %v1201, %v531
        %v1281 = vmul.f32 %v1203, %v532
        %v1282 = vmul.f32 %v1205, %v532
        %v1283 = vmul.f32 %v1209, %v533
        %v1284 = vmul.f32 %v1211, %v533
        %v1285 = vmul.f32 %v1213, %v534
        %v1286 = vmul.f32 %v1215, %v534
        %v1287 = vmul.f32 %v1219, %v535
        %v1288 = vmul.f32 %v1221, %v535
        %v1289 = vmul.f32 %v1223, %v536
        %v1290 = vmul.f32 %v1225, %v536
        %v1291 = vadd.f32 %v1227, %v1259
        %v1292 = vadd.f32 %v1228, %v1260
        %v1293 = vadd.f32 %v1229, %v1261
        %v1294 = vadd.f32 %v1230, %v1262
        %v1295 = vadd.f32 %v1231, %v1263
        %v1296 = vadd.f32 %v1232, %v1264
        %v1297 = vadd.f32 %v1233, %v1265
        %v1298 = vadd.f32 %v1234, %v1266
        %v1299 = vadd.f32 %v1235, %v1267
        %v1300 = vadd.f32 %v1236, %v1268
        %v1301 = vadd.f32 %v1237, %v1269
        %v1302 = vadd.f32 %v1238, %v1270
        %v1303 = vadd.f32 %v1239, %v1271
        %v1304 = vadd.f32 %v1240, %v1272
        %v1305 = vadd.f32 %v1241, %v1273
        %v1306 = vadd.f32 %v1242, %v1274
        %v1307 = vadd.f32 %v1243, %v1275
        %v1308 = vadd.f32 %v1244, %v1276
        %v1309 = vadd.f32 %v1245, %v1277
        %v1310 = vadd.f32 %v1246, %v1278
        %v1311 = vadd.f32 %v1247, %v1279
        %v1312 = vadd.f32 %v1248, %v1280
        %v1313 = vadd.f32 %v1249, %v1281
        %v1314 = vadd.f32 %v1250, %v1282
        %v1315 = vadd.f32 %v1251, %v1283
        %v1316 = vadd.f32 %v1252, %v1284
        %v1317 = vadd.f32 %v1253, %v1285
        %v1318 = vadd.f32 %v1254, %v1286
        %v1319 = vadd.f32 %v1255, %v1287
        %v1320 = vadd.f32 %v1256, %v1288
        %v1321 = vadd.f32 %v1257, %v1289
        %v1322 = vadd.f32 %v1258, %v1290
        %v1323 = vpack.c.bf16 %v1293, %v1291
        %v1324 = vpack.c.bf16 %v1294, %v1292
        %v1325 = vpack.c.bf16 %v1297, %v1295
        %v1326 = vpack.c.bf16 %v1298, %v1296
        %v1327 = vpack.c.bf16 %v1301, %v1299
        %v1328 = vpack.c.bf16 %v1302, %v1300
        %v1329 = vpack.c.bf16 %v1305, %v1303
        %v1330 = vpack.c.bf16 %v1306, %v1304
        %v1331 = vpack.c.bf16 %v1309, %v1307
        %v1332 = vpack.c.bf16 %v1310, %v1308
        %v1333 = vpack.c.bf16 %v1313, %v1311
        %v1334 = vpack.c.bf16 %v1314, %v1312
        %v1335 = vpack.c.bf16 %v1317, %v1315
        %v1336 = vpack.c.bf16 %v1318, %v1316
        %v1337 = vpack.c.bf16 %v1321, %v1319
        %v1338 = vpack.c.bf16 %v1322, %v1320
        %v1355 = vunpack.c.l.b16 %v1323
        %v1356 = vunpack.c.l.b16 %v1324
        %v1357 = vunpack.c.h.b16 %v1323
        %v1358 = vunpack.c.h.b16 %v1324
        %v1359 = vunpack.c.l.b16 %v1325
        %v1360 = vunpack.c.l.b16 %v1326
        %v1361 = vunpack.c.h.b16 %v1325
        %v1362 = vunpack.c.h.b16 %v1326
        %v1363 = vunpack.c.l.b16 %v1327
        %v1364 = vunpack.c.l.b16 %v1328
        %v1365 = vunpack.c.h.b16 %v1327
        %v1366 = vunpack.c.h.b16 %v1328
        %v1367 = vunpack.c.l.b16 %v1329
        %v1368 = vunpack.c.l.b16 %v1330
        %v1369 = vunpack.c.h.b16 %v1329
        %v1370 = vunpack.c.h.b16 %v1330
        %v1371 = vunpack.c.l.b16 %v1331
        %v1372 = vunpack.c.l.b16 %v1332
        %v1373 = vunpack.c.h.b16 %v1331
        %v1374 = vunpack.c.h.b16 %v1332
        %v1375 = vunpack.c.l.b16 %v1333
        %v1376 = vunpack.c.l.b16 %v1334
        %v1377 = vunpack.c.h.b16 %v1333
        %v1378 = vunpack.c.h.b16 %v1334
        %v1379 = vunpack.c.l.b16 %v1335
        %v1380 = vunpack.c.l.b16 %v1336
        %v1381 = vunpack.c.h.b16 %v1335
        %v1382 = vunpack.c.h.b16 %v1336
        %v1383 = vunpack.c.l.b16 %v1337
        %v1384 = vunpack.c.l.b16 %v1338
        %v1385 = vunpack.c.h.b16 %v1337
        %v1386 = vunpack.c.h.b16 %v1338
        %v1387 = vpack.c.b16 %v1356, %v1355
        %v1388 = vpack.c.b16 %v1358, %v1357
        %v1389 = vpack.c.b16 %v1360, %v1359
        %v1390 = vpack.c.b16 %v1362, %v1361
        %v1391 = vpack.c.b16 %v1364, %v1363
        %v1392 = vpack.c.b16 %v1366, %v1365
        %v1393 = vpack.c.b16 %v1368, %v1367
        %v1394 = vpack.c.b16 %v1370, %v1369
        %v1395 = vpack.c.b16 %v1372, %v1371
        %v1396 = vpack.c.b16 %v1374, %v1373
        %v1397 = vpack.c.b16 %v1376, %v1375
        %v1398 = vpack.c.b16 %v1378, %v1377
        %v1399 = vpack.c.b16 %v1380, %v1379
        %v1400 = vpack.c.b16 %v1382, %v1381
        %v1401 = vpack.c.b16 %v1384, %v1383
        %v1402 = vpack.c.b16 %v1386, %v1385
        %1419 = vst [vmem:[%s468] sm:$0xff] %v1387
        %1420 = vst [vmem:[%s468 + $0x8] sm:$0xff] %v1388
        %1421 = vst [vmem:[%s468 + $0x10] sm:$0xff] %v1389
        %1422 = vst [vmem:[%s468 + $0x18] sm:$0xff] %v1390
        %1423 = vst [vmem:[%s468 + $0x20] sm:$0xff] %v1391
        %1424 = vst [vmem:[%s468 + $0x28] sm:$0xff] %v1392
        %1425 = vst [vmem:[%s468 + $0x30] sm:$0xff] %v1393
        %1426 = vst [vmem:[%s468 + $0x38] sm:$0xff] %v1394
        %1427 = vst [vmem:[%s468 + $0x40] sm:$0xff] %v1395
        %1428 = vst [vmem:[%s468 + $0x48] sm:$0xff] %v1396
        %1429 = vst [vmem:[%s468 + $0x50] sm:$0xff] %v1397
        %1430 = vst [vmem:[%s468 + $0x58] sm:$0xff] %v1398
        %1431 = vst [vmem:[%s468 + $0x60] sm:$0xff] %v1399
        %1432 = vst [vmem:[%s468 + $0x68] sm:$0xff] %v1400
        %1433 = vst [vmem:[%s468 + $0x70] sm:$0xff] %v1401
        %1434 = vst [vmem:[%s468 + $0x78] sm:$0xff] %v1402
        %v1435 = vld [vmem:[#allocation7] sm:$0xff]
        %v1436 = vld [vmem:[#allocation7 + $0x8] sm:$0xff]
        %v1437 = vld [vmem:[#allocation7 + $0x10] sm:$0xff]
        %v1438 = vld [vmem:[#allocation7 + $0x18] sm:$0xff]
        %v1439 = vld [vmem:[#allocation7 + $0x20] sm:$0xff]
        %v1440 = vld [vmem:[#allocation7 + $0x28] sm:$0xff]
        %v1441 = vld [vmem:[#allocation7 + $0x30] sm:$0xff]
        %v1442 = vld [vmem:[#allocation7 + $0x38] sm:$0xff]
        %v1443 = vld [vmem:[#allocation7 + $0x40] sm:$0xff]
        %v1444 = vld [vmem:[#allocation7 + $0x48] sm:$0xff]
        %v1445 = vld [vmem:[#allocation7 + $0x50] sm:$0xff]
        %v1446 = vld [vmem:[#allocation7 + $0x58] sm:$0xff]
        %v1447 = vld [vmem:[#allocation7 + $0x60] sm:$0xff]
        %v1448 = vld [vmem:[#allocation7 + $0x68] sm:$0xff]
        %v1449 = vld [vmem:[#allocation7 + $0x70] sm:$0xff]
        %v1450 = vld [vmem:[#allocation7 + $0x78] sm:$0xff]
        %v1451 = vld [vmem:[#allocation7 + $0x80] sm:$0xff]
        %v1452 = vld [vmem:[#allocation7 + $0x88] sm:$0xff]
        %v1453 = vld [vmem:[#allocation7 + $0x90] sm:$0xff]
        %v1454 = vld [vmem:[#allocation7 + $0x98] sm:$0xff]
        %v1455 = vld [vmem:[#allocation7 + $0xa0] sm:$0xff]
        %v1456 = vld [vmem:[#allocation7 + $0xa8] sm:$0xff]
        %v1457 = vld [vmem:[#allocation7 + $0xb0] sm:$0xff]
        %v1458 = vld [vmem:[#allocation7 + $0xb8] sm:$0xff]
        %v1459 = vld [vmem:[#allocation7 + $0xc0] sm:$0xff]
        %v1460 = vld [vmem:[#allocation7 + $0xc8] sm:$0xff]
        %v1461 = vld [vmem:[#allocation7 + $0xd0] sm:$0xff]
        %v1462 = vld [vmem:[#allocation7 + $0xd8] sm:$0xff]
        %v1463 = vld [vmem:[#allocation7 + $0xe0] sm:$0xff]
        %v1464 = vld [vmem:[#allocation7 + $0xe8] sm:$0xff]
        %v1465 = vld [vmem:[#allocation7 + $0xf0] sm:$0xff]
        %v1466 = vld [vmem:[#allocation7 + $0xf8] sm:$0xff]
        %v1467 = vld [vmem:[#allocation7 + $0x100] sm:$0xff]
        %v1468 = vld [vmem:[#allocation7 + $0x108] sm:$0xff]
        %v1469 = vld [vmem:[#allocation7 + $0x110] sm:$0xff]
        %v1470 = vld [vmem:[#allocation7 + $0x118] sm:$0xff]
        %v1471 = vld [vmem:[#allocation7 + $0x120] sm:$0xff]
        %v1472 = vld [vmem:[#allocation7 + $0x128] sm:$0xff]
        %v1473 = vld [vmem:[#allocation7 + $0x130] sm:$0xff]
        %v1474 = vld [vmem:[#allocation7 + $0x138] sm:$0xff]
        %v1475 = vld [vmem:[#allocation7 + $0x140] sm:$0xff]
        %v1476 = vld [vmem:[#allocation7 + $0x148] sm:$0xff]
        %v1477 = vld [vmem:[#allocation7 + $0x150] sm:$0xff]
        %v1478 = vld [vmem:[#allocation7 + $0x158] sm:$0xff]
        %v1479 = vld [vmem:[#allocation7 + $0x160] sm:$0xff]
        %v1480 = vld [vmem:[#allocation7 + $0x168] sm:$0xff]
        %v1481 = vld [vmem:[#allocation7 + $0x170] sm:$0xff]
        %v1482 = vld [vmem:[#allocation7 + $0x178] sm:$0xff]
        %v1483 = vld [vmem:[#allocation7 + $0x180] sm:$0xff]
        %v1484 = vld [vmem:[#allocation7 + $0x188] sm:$0xff]
        %v1485 = vld [vmem:[#allocation7 + $0x190] sm:$0xff]
        %v1486 = vld [vmem:[#allocation7 + $0x198] sm:$0xff]
        %v1487 = vld [vmem:[#allocation7 + $0x1a0] sm:$0xff]
        %v1488 = vld [vmem:[#allocation7 + $0x1a8] sm:$0xff]
        %v1489 = vld [vmem:[#allocation7 + $0x1b0] sm:$0xff]
        %v1490 = vld [vmem:[#allocation7 + $0x1b8] sm:$0xff]
        %v1491 = vld [vmem:[#allocation7 + $0x1c0] sm:$0xff]
        %v1492 = vld [vmem:[#allocation7 + $0x1c8] sm:$0xff]
        %v1493 = vld [vmem:[#allocation7 + $0x1d0] sm:$0xff]
        %v1494 = vld [vmem:[#allocation7 + $0x1d8] sm:$0xff]
        %v1495 = vld [vmem:[#allocation7 + $0x1e0] sm:$0xff]
        %v1496 = vld [vmem:[#allocation7 + $0x1e8] sm:$0xff]
        %v1497 = vld [vmem:[#allocation7 + $0x1f0] sm:$0xff]
        %v1498 = vld [vmem:[#allocation7 + $0x1f8] sm:$0xff]
        %v1563 = vunpack.c.l.b16 %v1435
        %v1564 = vunpack.c.h.b16 %v1435
        %v1565 = vunpack.c.l.b16 %v1436
        %v1566 = vunpack.c.h.b16 %v1436
        %v1567 = vunpack.c.l.b16 %v1437
        %v1568 = vunpack.c.h.b16 %v1437
        %v1569 = vunpack.c.l.b16 %v1438
        %v1570 = vunpack.c.h.b16 %v1438
        %v1571 = vunpack.c.l.b16 %v1439
        %v1572 = vunpack.c.h.b16 %v1439
        %v1573 = vunpack.c.l.b16 %v1440
        %v1574 = vunpack.c.h.b16 %v1440
        %v1575 = vunpack.c.l.b16 %v1441
        %v1576 = vunpack.c.h.b16 %v1441
        %v1577 = vunpack.c.l.b16 %v1442
        %v1578 = vunpack.c.h.b16 %v1442
        %v1579 = vunpack.c.l.b16 %v1443
        %v1580 = vunpack.c.h.b16 %v1443
        %v1581 = vunpack.c.l.b16 %v1444
        %v1582 = vunpack.c.h.b16 %v1444
        %v1583 = vunpack.c.l.b16 %v1445
        %v1584 = vunpack.c.h.b16 %v1445
        %v1585 = vunpack.c.l.b16 %v1446
        %v1586 = vunpack.c.h.b16 %v1446
        %v1587 = vunpack.c.l.b16 %v1447
        %v1588 = vunpack.c.h.b16 %v1447
        %v1589 = vunpack.c.l.b16 %v1448
        %v1590 = vunpack.c.h.b16 %v1448
        %v1591 = vunpack.c.l.b16 %v1449
        %v1592 = vunpack.c.h.b16 %v1449
        %v1593 = vunpack.c.l.b16 %v1450
        %v1594 = vunpack.c.h.b16 %v1450
        %v1595 = vunpack.c.l.b16 %v1451
        %v1596 = vunpack.c.h.b16 %v1451
        %v1597 = vunpack.c.l.b16 %v1452
        %v1598 = vunpack.c.h.b16 %v1452
        %v1599 = vunpack.c.l.b16 %v1453
        %v1600 = vunpack.c.h.b16 %v1453
        %v1601 = vunpack.c.l.b16 %v1454
        %v1602 = vunpack.c.h.b16 %v1454
        %v1603 = vunpack.c.l.b16 %v1455
        %v1604 = vunpack.c.h.b16 %v1455
        %v1605 = vunpack.c.l.b16 %v1456
        %v1606 = vunpack.c.h.b16 %v1456
        %v1607 = vunpack.c.l.b16 %v1457
        %v1608 = vunpack.c.h.b16 %v1457
        %v1609 = vunpack.c.l.b16 %v1458
        %v1610 = vunpack.c.h.b16 %v1458
        %v1611 = vunpack.c.l.b16 %v1459
        %v1612 = vunpack.c.h.b16 %v1459
        %v1613 = vunpack.c.l.b16 %v1460
        %v1614 = vunpack.c.h.b16 %v1460
        %v1615 = vunpack.c.l.b16 %v1461
        %v1616 = vunpack.c.h.b16 %v1461
        %v1617 = vunpack.c.l.b16 %v1462
        %v1618 = vunpack.c.h.b16 %v1462
        %v1619 = vunpack.c.l.b16 %v1463
        %v1620 = vunpack.c.h.b16 %v1463
        %v1621 = vunpack.c.l.b16 %v1464
        %v1622 = vunpack.c.h.b16 %v1464
        %v1623 = vunpack.c.l.b16 %v1465
        %v1624 = vunpack.c.h.b16 %v1465
        %v1625 = vunpack.c.l.b16 %v1466
        %v1626 = vunpack.c.h.b16 %v1466
        %v1627 = vunpack.c.l.b16 %v1467
        %v1628 = vunpack.c.h.b16 %v1467
        %v1629 = vunpack.c.l.b16 %v1468
        %v1630 = vunpack.c.h.b16 %v1468
        %v1631 = vunpack.c.l.b16 %v1469
        %v1632 = vunpack.c.h.b16 %v1469
        %v1633 = vunpack.c.l.b16 %v1470
        %v1634 = vunpack.c.h.b16 %v1470
        %v1635 = vunpack.c.l.b16 %v1471
        %v1636 = vunpack.c.h.b16 %v1471
        %v1637 = vunpack.c.l.b16 %v1472
        %v1638 = vunpack.c.h.b16 %v1472
        %v1639 = vunpack.c.l.b16 %v1473
        %v1640 = vunpack.c.h.b16 %v1473
        %v1641 = vunpack.c.l.b16 %v1474
        %v1642 = vunpack.c.h.b16 %v1474
        %v1643 = vunpack.c.l.b16 %v1475
        %v1644 = vunpack.c.h.b16 %v1475
        %v1645 = vunpack.c.l.b16 %v1476
        %v1646 = vunpack.c.h.b16 %v1476
        %v1647 = vunpack.c.l.b16 %v1477
        %v1648 = vunpack.c.h.b16 %v1477
        %v1649 = vunpack.c.l.b16 %v1478
        %v1650 = vunpack.c.h.b16 %v1478
        %v1651 = vunpack.c.l.b16 %v1479
        %v1652 = vunpack.c.h.b16 %v1479
        %v1653 = vunpack.c.l.b16 %v1480
        %v1654 = vunpack.c.h.b16 %v1480
        %v1655 = vunpack.c.l.b16 %v1481
        %v1656 = vunpack.c.h.b16 %v1481
        %v1657 = vunpack.c.l.b16 %v1482
        %v1658 = vunpack.c.h.b16 %v1482
        %v1659 = vunpack.c.l.b16 %v1483
        %v1660 = vunpack.c.h.b16 %v1483
        %v1661 = vunpack.c.l.b16 %v1484
        %v1662 = vunpack.c.h.b16 %v1484
        %v1663 = vunpack.c.l.b16 %v1485
        %v1664 = vunpack.c.h.b16 %v1485
        %v1665 = vunpack.c.l.b16 %v1486
        %v1666 = vunpack.c.h.b16 %v1486
        %v1667 = vunpack.c.l.b16 %v1487
        %v1668 = vunpack.c.h.b16 %v1487
        %v1669 = vunpack.c.l.b16 %v1488
        %v1670 = vunpack.c.h.b16 %v1488
        %v1671 = vunpack.c.l.b16 %v1489
        %v1672 = vunpack.c.h.b16 %v1489
        %v1673 = vunpack.c.l.b16 %v1490
        %v1674 = vunpack.c.h.b16 %v1490
        %v1675 = vunpack.c.l.b16 %v1491
        %v1676 = vunpack.c.h.b16 %v1491
        %v1677 = vunpack.c.l.b16 %v1492
        %v1678 = vunpack.c.h.b16 %v1492
        %v1679 = vunpack.c.l.b16 %v1493
        %v1680 = vunpack.c.h.b16 %v1493
        %v1681 = vunpack.c.l.b16 %v1494
        %v1682 = vunpack.c.h.b16 %v1494
        %v1683 = vunpack.c.l.b16 %v1495
        %v1684 = vunpack.c.h.b16 %v1495
        %v1685 = vunpack.c.l.b16 %v1496
        %v1686 = vunpack.c.h.b16 %v1496
        %v1687 = vunpack.c.l.b16 %v1497
        %v1688 = vunpack.c.h.b16 %v1497
        %v1689 = vunpack.c.l.b16 %v1498
        %v1690 = vunpack.c.h.b16 %v1498
        %v1691 = vpack.c.b16 %v1567, %v1563
        %v1692 = vpack.c.b16 %v1568, %v1564
        %v1693 = vpack.c.b16 %v1569, %v1565
        %v1694 = vpack.c.b16 %v1570, %v1566
        %v1695 = vpack.c.b16 %v1575, %v1571
        %v1696 = vpack.c.b16 %v1576, %v1572
        %v1697 = vpack.c.b16 %v1577, %v1573
        %v1698 = vpack.c.b16 %v1578, %v1574
        %v1699 = vpack.c.b16 %v1583, %v1579
        %v1700 = vpack.c.b16 %v1584, %v1580
        %v1701 = vpack.c.b16 %v1585, %v1581
        %v1702 = vpack.c.b16 %v1586, %v1582
        %v1703 = vpack.c.b16 %v1591, %v1587
        %v1704 = vpack.c.b16 %v1592, %v1588
        %v1705 = vpack.c.b16 %v1593, %v1589
        %v1706 = vpack.c.b16 %v1594, %v1590
        %v1707 = vpack.c.b16 %v1599, %v1595
        %v1708 = vpack.c.b16 %v1600, %v1596
        %v1709 = vpack.c.b16 %v1601, %v1597
        %v1710 = vpack.c.b16 %v1602, %v1598
        %v1711 = vpack.c.b16 %v1607, %v1603
        %v1712 = vpack.c.b16 %v1608, %v1604
        %v1713 = vpack.c.b16 %v1609, %v1605
        %v1714 = vpack.c.b16 %v1610, %v1606
        %v1715 = vpack.c.b16 %v1615, %v1611
        %v1716 = vpack.c.b16 %v1616, %v1612
        %v1717 = vpack.c.b16 %v1617, %v1613
        %v1718 = vpack.c.b16 %v1618, %v1614
        %v1719 = vpack.c.b16 %v1623, %v1619
        %v1720 = vpack.c.b16 %v1624, %v1620
        %v1721 = vpack.c.b16 %v1625, %v1621
        %v1722 = vpack.c.b16 %v1626, %v1622
        %v1723 = vpack.c.b16 %v1631, %v1627
        %v1724 = vpack.c.b16 %v1632, %v1628
        %v1725 = vpack.c.b16 %v1633, %v1629
        %v1726 = vpack.c.b16 %v1634, %v1630
        %v1727 = vpack.c.b16 %v1639, %v1635
        %v1728 = vpack.c.b16 %v1640, %v1636
        %v1729 = vpack.c.b16 %v1641, %v1637
        %v1730 = vpack.c.b16 %v1642, %v1638
        %v1731 = vpack.c.b16 %v1647, %v1643
        %v1732 = vpack.c.b16 %v1648, %v1644
        %v1733 = vpack.c.b16 %v1649, %v1645
        %v1734 = vpack.c.b16 %v1650, %v1646
        %v1735 = vpack.c.b16 %v1655, %v1651
        %v1736 = vpack.c.b16 %v1656, %v1652
        %v1737 = vpack.c.b16 %v1657, %v1653
        %v1738 = vpack.c.b16 %v1658, %v1654
        %v1739 = vpack.c.b16 %v1663, %v1659
        %v1740 = vpack.c.b16 %v1664, %v1660
        %v1741 = vpack.c.b16 %v1665, %v1661
        %v1742 = vpack.c.b16 %v1666, %v1662
        %v1743 = vpack.c.b16 %v1671, %v1667
        %v1744 = vpack.c.b16 %v1672, %v1668
        %v1745 = vpack.c.b16 %v1673, %v1669
        %v1746 = vpack.c.b16 %v1674, %v1670
        %v1747 = vpack.c.b16 %v1679, %v1675
        %v1748 = vpack.c.b16 %v1680, %v1676
        %v1749 = vpack.c.b16 %v1681, %v1677
        %v1750 = vpack.c.b16 %v1682, %v1678
        %v1751 = vpack.c.b16 %v1687, %v1683
        %v1752 = vpack.c.b16 %v1688, %v1684
        %v1753 = vpack.c.b16 %v1689, %v1685
        %v1754 = vpack.c.b16 %v1690, %v1686
        %1819 = vmatprep.subr.bf16.mxu0 %v1720
        %1820 = vmatpush1.bf16.msra.mxu0 %v1719
        %1821 = vmatprep.subr.bf16.mxu0 %v1716
        %1822 = vmatpush1.bf16.msra.mxu0 %v1715
        %1823 = vmatprep.subr.bf16.mxu0 %v1712
        %1824 = vmatpush1.bf16.msra.mxu0 %v1711
        %1825 = vmatprep.subr.bf16.mxu0 %v1708
        %1826 = vmatpush1.bf16.msra.mxu0 %v1707
        %1827 = vmatprep.subr.bf16.mxu0 %v1704
        %1828 = vmatpush1.bf16.msra.mxu0 %v1703
        %1829 = vmatprep.subr.bf16.mxu0 %v1700
        %1830 = vmatpush1.bf16.msra.mxu0 %v1699
        %1831 = vmatprep.subr.bf16.mxu0 %v1696
        %1832 = vmatpush1.bf16.msra.mxu0 %v1695
        %1833 = vmatprep.subr.bf16.mxu0 %v1692
        %1834 = vmatpush1.bf16.msra.mxu0 %v1691
        %1835 = vmatprep.subr.bf16.mxu0 %v1752
        %1836 = vmatpush2.bf16.msra.mxu0 %v1751
        %1837 = vmatprep.subr.bf16.mxu0 %v1748
        %1838 = vmatpush2.bf16.msra.mxu0 %v1747
        %1839 = vmatprep.subr.bf16.mxu0 %v1744
        %1840 = vmatpush2.bf16.msra.mxu0 %v1743
        %1841 = vmatprep.subr.bf16.mxu0 %v1740
        %1842 = vmatpush2.bf16.msra.mxu0 %v1739
        %1843 = vmatprep.subr.bf16.mxu0 %v1736
        %1844 = vmatpush2.bf16.msra.mxu0 %v1735
        %1845 = vmatprep.subr.bf16.mxu0 %v1732
        %1846 = vmatpush2.bf16.msra.mxu0 %v1731
        %1847 = vmatprep.subr.bf16.mxu0 %v1728
        %1848 = vmatpush2.bf16.msra.mxu0 %v1727
        %1849 = vmatprep.subr.bf16.mxu0 %v1724
        %1850 = vmatpush2.bf16.msra.mxu0 %v1723
        %1851 = vmatprep.mubr.bf16.mxu0 %v650
        %1852 = vmatmul.mubr.bf16.gmra.mxu0 %v649
        %v1853 = vpop.f32.mrf.mxu0
        %v1854 = vadd.f32 0.0, %v1853
        %v1855 = vpop.f32.mrf.mxu0
        %v1856 = vadd.f32 0.0, %v1855
        %v1857 = vpop.f32.mrf.mxu0
        %v1858 = vadd.f32 0.0, %v1857
        %v1859 = vpop.f32.mrf.mxu0
        %v1860 = vadd.f32 0.0, %v1859
        %1861 = vmatprep.mubr.bf16.mxu0 %v652
        %1862 = vmatmul.mubr.bf16.gmra.mxu0 %v651
        %v1863 = vpop.f32.mrf.mxu0
        %v1864 = vadd.f32 0.0, %v1863
        %v1865 = vpop.f32.mrf.mxu0
        %v1866 = vadd.f32 0.0, %v1865
        %v1867 = vpop.f32.mrf.mxu0
        %v1868 = vadd.f32 0.0, %v1867
        %v1869 = vpop.f32.mrf.mxu0
        %v1870 = vadd.f32 0.0, %v1869
        %1871 = vmatprep.mubr.bf16.mxu0 %v654
        %1872 = vmatmul.mubr.bf16.gmra.mxu0 %v653
        %v1873 = vpop.f32.mrf.mxu0
        %v1874 = vadd.f32 0.0, %v1873
        %v1875 = vpop.f32.mrf.mxu0
        %v1876 = vadd.f32 0.0, %v1875
        %v1877 = vpop.f32.mrf.mxu0
        %v1878 = vadd.f32 0.0, %v1877
        %v1879 = vpop.f32.mrf.mxu0
        %v1880 = vadd.f32 0.0, %v1879
        %1881 = vmatprep.mubr.bf16.mxu0 %v656
        %1882 = vmatmul.mubr.bf16.gmra.mxu0 %v655
        %v1883 = vpop.f32.mrf.mxu0
        %v1884 = vadd.f32 0.0, %v1883
        %v1885 = vpop.f32.mrf.mxu0
        %v1886 = vadd.f32 0.0, %v1885
        %v1887 = vpop.f32.mrf.mxu0
        %v1888 = vadd.f32 0.0, %v1887
        %v1889 = vpop.f32.mrf.mxu0
        %v1890 = vadd.f32 0.0, %v1889
        %1891 = vmatprep.mubr.bf16.mxu0 %v658
        %1892 = vmatmul.mubr.bf16.gmra.mxu0 %v657
        %v1893 = vpop.f32.mrf.mxu0
        %v1894 = vadd.f32 0.0, %v1893
        %v1895 = vpop.f32.mrf.mxu0
        %v1896 = vadd.f32 0.0, %v1895
        %v1897 = vpop.f32.mrf.mxu0
        %v1898 = vadd.f32 0.0, %v1897
        %v1899 = vpop.f32.mrf.mxu0
        %v1900 = vadd.f32 0.0, %v1899
        %1901 = vmatprep.mubr.bf16.mxu0 %v660
        %1902 = vmatmul.mubr.bf16.gmra.mxu0 %v659
        %v1903 = vpop.f32.mrf.mxu0
        %v1904 = vadd.f32 0.0, %v1903
        %v1905 = vpop.f32.mrf.mxu0
        %v1906 = vadd.f32 0.0, %v1905
        %v1907 = vpop.f32.mrf.mxu0
        %v1908 = vadd.f32 0.0, %v1907
        %v1909 = vpop.f32.mrf.mxu0
        %v1910 = vadd.f32 0.0, %v1909
        %1911 = vmatprep.mubr.bf16.mxu0 %v662
        %1912 = vmatmul.mubr.bf16.gmra.mxu0 %v661
        %v1913 = vpop.f32.mrf.mxu0
        %v1914 = vadd.f32 0.0, %v1913
        %v1915 = vpop.f32.mrf.mxu0
        %v1916 = vadd.f32 0.0, %v1915
        %v1917 = vpop.f32.mrf.mxu0
        %v1918 = vadd.f32 0.0, %v1917
        %v1919 = vpop.f32.mrf.mxu0
        %v1920 = vadd.f32 0.0, %v1919
        %1921 = vmatprep.mubr.bf16.mxu0 %v664
        %1922 = vmatmul.mubr.bf16.gmra.mxu0 %v663
        %v1923 = vpop.f32.mrf.mxu0
        %v1924 = vadd.f32 0.0, %v1923
        %v1925 = vpop.f32.mrf.mxu0
        %v1926 = vadd.f32 0.0, %v1925
        %v1927 = vpop.f32.mrf.mxu0
        %v1928 = vadd.f32 0.0, %v1927
        %v1929 = vpop.f32.mrf.mxu0
        %v1930 = vadd.f32 0.0, %v1929
        %1931 = vdwg.mxu0
        %1932 = vmatprep.subr.bf16.mxu0 %v1722
        %1933 = vmatpush1.bf16.msra.mxu0 %v1721
        %1934 = vmatprep.subr.bf16.mxu0 %v1718
        %1935 = vmatpush1.bf16.msra.mxu0 %v1717
        %1936 = vmatprep.subr.bf16.mxu0 %v1714
        %1937 = vmatpush1.bf16.msra.mxu0 %v1713
        %1938 = vmatprep.subr.bf16.mxu0 %v1710
        %1939 = vmatpush1.bf16.msra.mxu0 %v1709
        %1940 = vmatprep.subr.bf16.mxu0 %v1706
        %1941 = vmatpush1.bf16.msra.mxu0 %v1705
        %1942 = vmatprep.subr.bf16.mxu0 %v1702
        %1943 = vmatpush1.bf16.msra.mxu0 %v1701
        %1944 = vmatprep.subr.bf16.mxu0 %v1698
        %1945 = vmatpush1.bf16.msra.mxu0 %v1697
        %1946 = vmatprep.subr.bf16.mxu0 %v1694
        %1947 = vmatpush1.bf16.msra.mxu0 %v1693
        %1948 = vmatprep.subr.bf16.mxu0 %v1754
        %1949 = vmatpush2.bf16.msra.mxu0 %v1753
        %1950 = vmatprep.subr.bf16.mxu0 %v1750
        %1951 = vmatpush2.bf16.msra.mxu0 %v1749
        %1952 = vmatprep.subr.bf16.mxu0 %v1746
        %1953 = vmatpush2.bf16.msra.mxu0 %v1745
        %1954 = vmatprep.subr.bf16.mxu0 %v1742
        %1955 = vmatpush2.bf16.msra.mxu0 %v1741
        %1956 = vmatprep.subr.bf16.mxu0 %v1738
        %1957 = vmatpush2.bf16.msra.mxu0 %v1737
        %1958 = vmatprep.subr.bf16.mxu0 %v1734
        %1959 = vmatpush2.bf16.msra.mxu0 %v1733
        %1960 = vmatprep.subr.bf16.mxu0 %v1730
        %1961 = vmatpush2.bf16.msra.mxu0 %v1729
        %1962 = vmatprep.subr.bf16.mxu0 %v1726
        %1963 = vmatpush2.bf16.msra.mxu0 %v1725
        %1964 = vmatprep.mubr.bf16.mxu0 %v650
        %1965 = vmatmul.mubr.bf16.gmra.mxu0 %v649
        %v1966 = vpop.f32.mrf.mxu0
        %v1967 = vadd.f32 0.0, %v1966
        %v1968 = vpop.f32.mrf.mxu0
        %v1969 = vadd.f32 0.0, %v1968
        %v1970 = vpop.f32.mrf.mxu0
        %v1971 = vadd.f32 0.0, %v1970
        %v1972 = vpop.f32.mrf.mxu0
        %v1973 = vadd.f32 0.0, %v1972
        %1974 = vmatprep.mubr.bf16.mxu0 %v652
        %1975 = vmatmul.mubr.bf16.gmra.mxu0 %v651
        %v1976 = vpop.f32.mrf.mxu0
        %v1977 = vadd.f32 0.0, %v1976
        %v1978 = vpop.f32.mrf.mxu0
        %v1979 = vadd.f32 0.0, %v1978
        %v1980 = vpop.f32.mrf.mxu0
        %v1981 = vadd.f32 0.0, %v1980
        %v1982 = vpop.f32.mrf.mxu0
        %v1983 = vadd.f32 0.0, %v1982
        %1984 = vmatprep.mubr.bf16.mxu0 %v654
        %1985 = vmatmul.mubr.bf16.gmra.mxu0 %v653
        %v1986 = vpop.f32.mrf.mxu0
        %v1987 = vadd.f32 0.0, %v1986
        %v1988 = vpop.f32.mrf.mxu0
        %v1989 = vadd.f32 0.0, %v1988
        %v1990 = vpop.f32.mrf.mxu0
        %v1991 = vadd.f32 0.0, %v1990
        %v1992 = vpop.f32.mrf.mxu0
        %v1993 = vadd.f32 0.0, %v1992
        %1994 = vmatprep.mubr.bf16.mxu0 %v656
        %1995 = vmatmul.mubr.bf16.gmra.mxu0 %v655
        %v1996 = vpop.f32.mrf.mxu0
        %v1997 = vadd.f32 0.0, %v1996
        %v1998 = vpop.f32.mrf.mxu0
        %v1999 = vadd.f32 0.0, %v1998
        %v2000 = vpop.f32.mrf.mxu0
        %v2001 = vadd.f32 0.0, %v2000
        %v2002 = vpop.f32.mrf.mxu0
        %v2003 = vadd.f32 0.0, %v2002
        %2004 = vmatprep.mubr.bf16.mxu0 %v658
        %2005 = vmatmul.mubr.bf16.gmra.mxu0 %v657
        %v2006 = vpop.f32.mrf.mxu0
        %v2007 = vadd.f32 0.0, %v2006
        %v2008 = vpop.f32.mrf.mxu0
        %v2009 = vadd.f32 0.0, %v2008
        %v2010 = vpop.f32.mrf.mxu0
        %v2011 = vadd.f32 0.0, %v2010
        %v2012 = vpop.f32.mrf.mxu0
        %v2013 = vadd.f32 0.0, %v2012
        %2014 = vmatprep.mubr.bf16.mxu0 %v660
        %2015 = vmatmul.mubr.bf16.gmra.mxu0 %v659
        %v2016 = vpop.f32.mrf.mxu0
        %v2017 = vadd.f32 0.0, %v2016
        %v2018 = vpop.f32.mrf.mxu0
        %v2019 = vadd.f32 0.0, %v2018
        %v2020 = vpop.f32.mrf.mxu0
        %v2021 = vadd.f32 0.0, %v2020
        %v2022 = vpop.f32.mrf.mxu0
        %v2023 = vadd.f32 0.0, %v2022
        %2024 = vmatprep.mubr.bf16.mxu0 %v662
        %2025 = vmatmul.mubr.bf16.gmra.mxu0 %v661
        %v2026 = vpop.f32.mrf.mxu0
        %v2027 = vadd.f32 0.0, %v2026
        %v2028 = vpop.f32.mrf.mxu0
        %v2029 = vadd.f32 0.0, %v2028
        %v2030 = vpop.f32.mrf.mxu0
        %v2031 = vadd.f32 0.0, %v2030
        %v2032 = vpop.f32.mrf.mxu0
        %v2033 = vadd.f32 0.0, %v2032
        %2034 = vmatprep.mubr.bf16.mxu0 %v664
        %2035 = vmatmul.mubr.bf16.gmra.mxu0 %v663
        %v2036 = vpop.f32.mrf.mxu0
        %v2037 = vadd.f32 0.0, %v2036
        %v2038 = vpop.f32.mrf.mxu0
        %v2039 = vadd.f32 0.0, %v2038
        %v2040 = vpop.f32.mrf.mxu0
        %v2041 = vadd.f32 0.0, %v2040
        %v2042 = vpop.f32.mrf.mxu0
        %v2043 = vadd.f32 0.0, %v2042
        %2044 = vdwg.mxu0
        %v2045 = vmul.f32 %v1854, %v505
        %v2046 = vmul.f32 %v1856, %v505
        %v2047 = vmul.f32 %v1858, %v506
        %v2048 = vmul.f32 %v1860, %v506
        %v2049 = vmul.f32 %v1864, %v507
        %v2050 = vmul.f32 %v1866, %v507
        %v2051 = vmul.f32 %v1868, %v508
        %v2052 = vmul.f32 %v1870, %v508
        %v2053 = vmul.f32 %v1874, %v509
        %v2054 = vmul.f32 %v1876, %v509
        %v2055 = vmul.f32 %v1878, %v510
        %v2056 = vmul.f32 %v1880, %v510
        %v2057 = vmul.f32 %v1884, %v511
        %v2058 = vmul.f32 %v1886, %v511
        %v2059 = vmul.f32 %v1888, %v512
        %v2060 = vmul.f32 %v1890, %v512
        %v2061 = vmul.f32 %v1894, %v513
        %v2062 = vmul.f32 %v1896, %v513
        %v2063 = vmul.f32 %v1898, %v514
        %v2064 = vmul.f32 %v1900, %v514
        %v2065 = vmul.f32 %v1904, %v515
        %v2066 = vmul.f32 %v1906, %v515
        %v2067 = vmul.f32 %v1908, %v516
        %v2068 = vmul.f32 %v1910, %v516
        %v2069 = vmul.f32 %v1914, %v517
        %v2070 = vmul.f32 %v1916, %v517
        %v2071 = vmul.f32 %v1918, %v518
        %v2072 = vmul.f32 %v1920, %v518
        %v2073 = vmul.f32 %v1924, %v519
        %v2074 = vmul.f32 %v1926, %v519
        %v2075 = vmul.f32 %v1928, %v520
        %v2076 = vmul.f32 %v1930, %v520
        %v2077 = vmul.f32 %v1967, %v521
        %v2078 = vmul.f32 %v1969, %v521
        %v2079 = vmul.f32 %v1971, %v522
        %v2080 = vmul.f32 %v1973, %v522
        %v2081 = vmul.f32 %v1977, %v523
        %v2082 = vmul.f32 %v1979, %v523
        %v2083 = vmul.f32 %v1981, %v524
        %v2084 = vmul.f32 %v1983, %v524
        %v2085 = vmul.f32 %v1987, %v525
        %v2086 = vmul.f32 %v1989, %v525
        %v2087 = vmul.f32 %v1991, %v526
        %v2088 = vmul.f32 %v1993, %v526
        %v2089 = vmul.f32 %v1997, %v527
        %v2090 = vmul.f32 %v1999, %v527
        %v2091 = vmul.f32 %v2001, %v528
        %v2092 = vmul.f32 %v2003, %v528
        %v2093 = vmul.f32 %v2007, %v529
        %v2094 = vmul.f32 %v2009, %v529
        %v2095 = vmul.f32 %v2011, %v530
        %v2096 = vmul.f32 %v2013, %v530
        %v2097 = vmul.f32 %v2017, %v531
        %v2098 = vmul.f32 %v2019, %v531
        %v2099 = vmul.f32 %v2021, %v532
        %v2100 = vmul.f32 %v2023, %v532
        %v2101 = vmul.f32 %v2027, %v533
        %v2102 = vmul.f32 %v2029, %v533
        %v2103 = vmul.f32 %v2031, %v534
        %v2104 = vmul.f32 %v2033, %v534
        %v2105 = vmul.f32 %v2037, %v535
        %v2106 = vmul.f32 %v2039, %v535
        %v2107 = vmul.f32 %v2041, %v536
        %v2108 = vmul.f32 %v2043, %v536
        %v2109 = vadd.f32 %v2045, %v2077
        %v2110 = vadd.f32 %v2046, %v2078
        %v2111 = vadd.f32 %v2047, %v2079
        %v2112 = vadd.f32 %v2048, %v2080
        %v2113 = vadd.f32 %v2049, %v2081
        %v2114 = vadd.f32 %v2050, %v2082
        %v2115 = vadd.f32 %v2051, %v2083
        %v2116 = vadd.f32 %v2052, %v2084
        %v2117 = vadd.f32 %v2053, %v2085
        %v2118 = vadd.f32 %v2054, %v2086
        %v2119 = vadd.f32 %v2055, %v2087
        %v2120 = vadd.f32 %v2056, %v2088
        %v2121 = vadd.f32 %v2057, %v2089
        %v2122 = vadd.f32 %v2058, %v2090
        %v2123 = vadd.f32 %v2059, %v2091
        %v2124 = vadd.f32 %v2060, %v2092
        %v2125 = vadd.f32 %v2061, %v2093
        %v2126 = vadd.f32 %v2062, %v2094
        %v2127 = vadd.f32 %v2063, %v2095
        %v2128 = vadd.f32 %v2064, %v2096
        %v2129 = vadd.f32 %v2065, %v2097
        %v2130 = vadd.f32 %v2066, %v2098
        %v2131 = vadd.f32 %v2067, %v2099
        %v2132 = vadd.f32 %v2068, %v2100
        %v2133 = vadd.f32 %v2069, %v2101
        %v2134 = vadd.f32 %v2070, %v2102
        %v2135 = vadd.f32 %v2071, %v2103
        %v2136 = vadd.f32 %v2072, %v2104
        %v2137 = vadd.f32 %v2073, %v2105
        %v2138 = vadd.f32 %v2074, %v2106
        %v2139 = vadd.f32 %v2075, %v2107
        %v2140 = vadd.f32 %v2076, %v2108
        %v2141 = vpack.c.bf16 %v2111, %v2109
        %v2142 = vpack.c.bf16 %v2112, %v2110
        %v2143 = vpack.c.bf16 %v2115, %v2113
        %v2144 = vpack.c.bf16 %v2116, %v2114
        %v2145 = vpack.c.bf16 %v2119, %v2117
        %v2146 = vpack.c.bf16 %v2120, %v2118
        %v2147 = vpack.c.bf16 %v2123, %v2121
        %v2148 = vpack.c.bf16 %v2124, %v2122
        %v2149 = vpack.c.bf16 %v2127, %v2125
        %v2150 = vpack.c.bf16 %v2128, %v2126
        %v2151 = vpack.c.bf16 %v2131, %v2129
        %v2152 = vpack.c.bf16 %v2132, %v2130
        %v2153 = vpack.c.bf16 %v2135, %v2133
        %v2154 = vpack.c.bf16 %v2136, %v2134
        %v2155 = vpack.c.bf16 %v2139, %v2137
        %v2156 = vpack.c.bf16 %v2140, %v2138
        %v2173 = vunpack.c.l.b16 %v2141
        %v2174 = vunpack.c.l.b16 %v2142
        %v2175 = vunpack.c.h.b16 %v2141
        %v2176 = vunpack.c.h.b16 %v2142
        %v2177 = vunpack.c.l.b16 %v2143
        %v2178 = vunpack.c.l.b16 %v2144
        %v2179 = vunpack.c.h.b16 %v2143
        %v2180 = vunpack.c.h.b16 %v2144
        %v2181 = vunpack.c.l.b16 %v2145
        %v2182 = vunpack.c.l.b16 %v2146
        %v2183 = vunpack.c.h.b16 %v2145
        %v2184 = vunpack.c.h.b16 %v2146
        %v2185 = vunpack.c.l.b16 %v2147
        %v2186 = vunpack.c.l.b16 %v2148
        %v2187 = vunpack.c.h.b16 %v2147
        %v2188 = vunpack.c.h.b16 %v2148
        %v2189 = vunpack.c.l.b16 %v2149
        %v2190 = vunpack.c.l.b16 %v2150
        %v2191 = vunpack.c.h.b16 %v2149
        %v2192 = vunpack.c.h.b16 %v2150
        %v2193 = vunpack.c.l.b16 %v2151
        %v2194 = vunpack.c.l.b16 %v2152
        %v2195 = vunpack.c.h.b16 %v2151
        %v2196 = vunpack.c.h.b16 %v2152
        %v2197 = vunpack.c.l.b16 %v2153
        %v2198 = vunpack.c.l.b16 %v2154
        %v2199 = vunpack.c.h.b16 %v2153
        %v2200 = vunpack.c.h.b16 %v2154
        %v2201 = vunpack.c.l.b16 %v2155
        %v2202 = vunpack.c.l.b16 %v2156
        %v2203 = vunpack.c.h.b16 %v2155
        %v2204 = vunpack.c.h.b16 %v2156
        %v2205 = vpack.c.b16 %v2174, %v2173
        %v2206 = vpack.c.b16 %v2176, %v2175
        %v2207 = vpack.c.b16 %v2178, %v2177
        %v2208 = vpack.c.b16 %v2180, %v2179
        %v2209 = vpack.c.b16 %v2182, %v2181
        %v2210 = vpack.c.b16 %v2184, %v2183
        %v2211 = vpack.c.b16 %v2186, %v2185
        %v2212 = vpack.c.b16 %v2188, %v2187
        %v2213 = vpack.c.b16 %v2190, %v2189
        %v2214 = vpack.c.b16 %v2192, %v2191
        %v2215 = vpack.c.b16 %v2194, %v2193
        %v2216 = vpack.c.b16 %v2196, %v2195
        %v2217 = vpack.c.b16 %v2198, %v2197
        %v2218 = vpack.c.b16 %v2200, %v2199
        %v2219 = vpack.c.b16 %v2202, %v2201
        %v2220 = vpack.c.b16 %v2204, %v2203
        %2237 = vst [vmem:[%s475] sm:$0xff] %v2205
        %2238 = vst [vmem:[%s475 + $0x8] sm:$0xff] %v2206
        %2239 = vst [vmem:[%s475 + $0x10] sm:$0xff] %v2207
        %2240 = vst [vmem:[%s475 + $0x18] sm:$0xff] %v2208
        %2241 = vst [vmem:[%s475 + $0x20] sm:$0xff] %v2209
        %2242 = vst [vmem:[%s475 + $0x28] sm:$0xff] %v2210
        %2243 = vst [vmem:[%s475 + $0x30] sm:$0xff] %v2211
        %2244 = vst [vmem:[%s475 + $0x38] sm:$0xff] %v2212
        %2245 = vst [vmem:[%s475 + $0x40] sm:$0xff] %v2213
        %2246 = vst [vmem:[%s475 + $0x48] sm:$0xff] %v2214
        %2247 = vst [vmem:[%s475 + $0x50] sm:$0xff] %v2215
        %2248 = vst [vmem:[%s475 + $0x58] sm:$0xff] %v2216
        %2249 = vst [vmem:[%s475 + $0x60] sm:$0xff] %v2217
        %2250 = vst [vmem:[%s475 + $0x68] sm:$0xff] %v2218
        %2251 = vst [vmem:[%s475 + $0x70] sm:$0xff] %v2219
        %2252 = vst [vmem:[%s475 + $0x78] sm:$0xff] %v2220
        %v2253 = vld [vmem:[#allocation8] sm:$0xff]
        %v2254 = vld [vmem:[#allocation8 + $0x8] sm:$0xff]
        %v2255 = vld [vmem:[#allocation8 + $0x10] sm:$0xff]
        %v2256 = vld [vmem:[#allocation8 + $0x18] sm:$0xff]
        %v2257 = vld [vmem:[#allocation8 + $0x20] sm:$0xff]
        %v2258 = vld [vmem:[#allocation8 + $0x28] sm:$0xff]
        %v2259 = vld [vmem:[#allocation8 + $0x30] sm:$0xff]
        %v2260 = vld [vmem:[#allocation8 + $0x38] sm:$0xff]
        %v2261 = vld [vmem:[#allocation8 + $0x40] sm:$0xff]
        %v2262 = vld [vmem:[#allocation8 + $0x48] sm:$0xff]
        %v2263 = vld [vmem:[#allocation8 + $0x50] sm:$0xff]
        %v2264 = vld [vmem:[#allocation8 + $0x58] sm:$0xff]
        %v2265 = vld [vmem:[#allocation8 + $0x60] sm:$0xff]
        %v2266 = vld [vmem:[#allocation8 + $0x68] sm:$0xff]
        %v2267 = vld [vmem:[#allocation8 + $0x70] sm:$0xff]
        %v2268 = vld [vmem:[#allocation8 + $0x78] sm:$0xff]
        %v2269 = vld [vmem:[#allocation8 + $0x80] sm:$0xff]
        %v2270 = vld [vmem:[#allocation8 + $0x88] sm:$0xff]
        %v2271 = vld [vmem:[#allocation8 + $0x90] sm:$0xff]
        %v2272 = vld [vmem:[#allocation8 + $0x98] sm:$0xff]
        %v2273 = vld [vmem:[#allocation8 + $0xa0] sm:$0xff]
        %v2274 = vld [vmem:[#allocation8 + $0xa8] sm:$0xff]
        %v2275 = vld [vmem:[#allocation8 + $0xb0] sm:$0xff]
        %v2276 = vld [vmem:[#allocation8 + $0xb8] sm:$0xff]
        %v2277 = vld [vmem:[#allocation8 + $0xc0] sm:$0xff]
        %v2278 = vld [vmem:[#allocation8 + $0xc8] sm:$0xff]
        %v2279 = vld [vmem:[#allocation8 + $0xd0] sm:$0xff]
        %v2280 = vld [vmem:[#allocation8 + $0xd8] sm:$0xff]
        %v2281 = vld [vmem:[#allocation8 + $0xe0] sm:$0xff]
        %v2282 = vld [vmem:[#allocation8 + $0xe8] sm:$0xff]
        %v2283 = vld [vmem:[#allocation8 + $0xf0] sm:$0xff]
        %v2284 = vld [vmem:[#allocation8 + $0xf8] sm:$0xff]
        %v2317 = vunpack.c.l.b16 %v2253
        %v2318 = vunpack.c.h.b16 %v2253
        %v2319 = vunpack.c.l.b16 %v2254
        %v2320 = vunpack.c.h.b16 %v2254
        %v2321 = vunpack.c.l.b16 %v2255
        %v2322 = vunpack.c.h.b16 %v2255
        %v2323 = vunpack.c.l.b16 %v2256
        %v2324 = vunpack.c.h.b16 %v2256
        %v2325 = vunpack.c.l.b16 %v2257
        %v2326 = vunpack.c.h.b16 %v2257
        %v2327 = vunpack.c.l.b16 %v2258
        %v2328 = vunpack.c.h.b16 %v2258
        %v2329 = vunpack.c.l.b16 %v2259
        %v2330 = vunpack.c.h.b16 %v2259
        %v2331 = vunpack.c.l.b16 %v2260
        %v2332 = vunpack.c.h.b16 %v2260
        %v2333 = vunpack.c.l.b16 %v2261
        %v2334 = vunpack.c.h.b16 %v2261
        %v2335 = vunpack.c.l.b16 %v2262
        %v2336 = vunpack.c.h.b16 %v2262
        %v2337 = vunpack.c.l.b16 %v2263
        %v2338 = vunpack.c.h.b16 %v2263
        %v2339 = vunpack.c.l.b16 %v2264
        %v2340 = vunpack.c.h.b16 %v2264
        %v2341 = vunpack.c.l.b16 %v2265
        %v2342 = vunpack.c.h.b16 %v2265
        %v2343 = vunpack.c.l.b16 %v2266
        %v2344 = vunpack.c.h.b16 %v2266
        %v2345 = vunpack.c.l.b16 %v2267
        %v2346 = vunpack.c.h.b16 %v2267
        %v2347 = vunpack.c.l.b16 %v2268
        %v2348 = vunpack.c.h.b16 %v2268
        %v2349 = vunpack.c.l.b16 %v2269
        %v2350 = vunpack.c.h.b16 %v2269
        %v2351 = vunpack.c.l.b16 %v2270
        %v2352 = vunpack.c.h.b16 %v2270
        %v2353 = vunpack.c.l.b16 %v2271
        %v2354 = vunpack.c.h.b16 %v2271
        %v2355 = vunpack.c.l.b16 %v2272
        %v2356 = vunpack.c.h.b16 %v2272
        %v2357 = vunpack.c.l.b16 %v2273
        %v2358 = vunpack.c.h.b16 %v2273
        %v2359 = vunpack.c.l.b16 %v2274
        %v2360 = vunpack.c.h.b16 %v2274
        %v2361 = vunpack.c.l.b16 %v2275
        %v2362 = vunpack.c.h.b16 %v2275
        %v2363 = vunpack.c.l.b16 %v2276
        %v2364 = vunpack.c.h.b16 %v2276
        %v2365 = vunpack.c.l.b16 %v2277
        %v2366 = vunpack.c.h.b16 %v2277
        %v2367 = vunpack.c.l.b16 %v2278
        %v2368 = vunpack.c.h.b16 %v2278
        %v2369 = vunpack.c.l.b16 %v2279
        %v2370 = vunpack.c.h.b16 %v2279
        %v2371 = vunpack.c.l.b16 %v2280
        %v2372 = vunpack.c.h.b16 %v2280
        %v2373 = vunpack.c.l.b16 %v2281
        %v2374 = vunpack.c.h.b16 %v2281
        %v2375 = vunpack.c.l.b16 %v2282
        %v2376 = vunpack.c.h.b16 %v2282
        %v2377 = vunpack.c.l.b16 %v2283
        %v2378 = vunpack.c.h.b16 %v2283
        %v2379 = vunpack.c.l.b16 %v2284
        %v2380 = vunpack.c.h.b16 %v2284
        %v2381 = vpack.c.b16 %v2319, %v2317
        %v2382 = vpack.c.b16 %v2320, %v2318
        %v2383 = vpack.c.b16 %v2323, %v2321
        %v2384 = vpack.c.b16 %v2324, %v2322
        %v2385 = vpack.c.b16 %v2327, %v2325
        %v2386 = vpack.c.b16 %v2328, %v2326
        %v2387 = vpack.c.b16 %v2331, %v2329
        %v2388 = vpack.c.b16 %v2332, %v2330
        %v2389 = vpack.c.b16 %v2335, %v2333
        %v2390 = vpack.c.b16 %v2336, %v2334
        %v2391 = vpack.c.b16 %v2339, %v2337
        %v2392 = vpack.c.b16 %v2340, %v2338
        %v2393 = vpack.c.b16 %v2343, %v2341
        %v2394 = vpack.c.b16 %v2344, %v2342
        %v2395 = vpack.c.b16 %v2347, %v2345
        %v2396 = vpack.c.b16 %v2348, %v2346
        %v2397 = vpack.c.b16 %v2351, %v2349
        %v2398 = vpack.c.b16 %v2352, %v2350
        %v2399 = vpack.c.b16 %v2355, %v2353
        %v2400 = vpack.c.b16 %v2356, %v2354
        %v2401 = vpack.c.b16 %v2359, %v2357
        %v2402 = vpack.c.b16 %v2360, %v2358
        %v2403 = vpack.c.b16 %v2363, %v2361
        %v2404 = vpack.c.b16 %v2364, %v2362
        %v2405 = vpack.c.b16 %v2367, %v2365
        %v2406 = vpack.c.b16 %v2368, %v2366
        %v2407 = vpack.c.b16 %v2371, %v2369
        %v2408 = vpack.c.b16 %v2372, %v2370
        %v2409 = vpack.c.b16 %v2375, %v2373
        %v2410 = vpack.c.b16 %v2376, %v2374
        %v2411 = vpack.c.b16 %v2379, %v2377
        %v2412 = vpack.c.b16 %v2380, %v2378
        %2445 = vmatprep.subr.bf16.mxu0 %v2396
        %2446 = vmatpush1.bf16.msra.mxu0 %v2395
        %2447 = vmatprep.subr.bf16.mxu0 %v2394
        %2448 = vmatpush1.bf16.msra.mxu0 %v2393
        %2449 = vmatprep.subr.bf16.mxu0 %v2392
        %2450 = vmatpush1.bf16.msra.mxu0 %v2391
        %2451 = vmatprep.subr.bf16.mxu0 %v2390
        %2452 = vmatpush1.bf16.msra.mxu0 %v2389
        %2453 = vmatprep.subr.bf16.mxu0 %v2388
        %2454 = vmatpush1.bf16.msra.mxu0 %v2387
        %2455 = vmatprep.subr.bf16.mxu0 %v2386
        %2456 = vmatpush1.bf16.msra.mxu0 %v2385
        %2457 = vmatprep.subr.bf16.mxu0 %v2384
        %2458 = vmatpush1.bf16.msra.mxu0 %v2383
        %2459 = vmatprep.subr.bf16.mxu0 %v2382
        %2460 = vmatpush1.bf16.msra.mxu0 %v2381
        %2461 = vmatprep.subr.bf16.mxu0 %v2412
        %2462 = vmatpush2.bf16.msra.mxu0 %v2411
        %2463 = vmatprep.subr.bf16.mxu0 %v2410
        %2464 = vmatpush2.bf16.msra.mxu0 %v2409
        %2465 = vmatprep.subr.bf16.mxu0 %v2408
        %2466 = vmatpush2.bf16.msra.mxu0 %v2407
        %2467 = vmatprep.subr.bf16.mxu0 %v2406
        %2468 = vmatpush2.bf16.msra.mxu0 %v2405
        %2469 = vmatprep.subr.bf16.mxu0 %v2404
        %2470 = vmatpush2.bf16.msra.mxu0 %v2403
        %2471 = vmatprep.subr.bf16.mxu0 %v2402
        %2472 = vmatpush2.bf16.msra.mxu0 %v2401
        %2473 = vmatprep.subr.bf16.mxu0 %v2400
        %2474 = vmatpush2.bf16.msra.mxu0 %v2399
        %2475 = vmatprep.subr.bf16.mxu0 %v2398
        %2476 = vmatpush2.bf16.msra.mxu0 %v2397
        %2477 = vmatprep.mubr.bf16.mxu0 %v650
        %2478 = vmatmul.mubr.bf16.gmra.mxu0 %v649
        %v2479 = vpop.f32.mrf.mxu0
        %v2480 = vadd.f32 0.0, %v2479
        %v2481 = vpop.f32.mrf.mxu0
        %v2482 = vadd.f32 0.0, %v2481
        %v2483 = vpop.f32.mrf.mxu0
        %v2484 = vadd.f32 0.0, %v2483
        %v2485 = vpop.f32.mrf.mxu0
        %v2486 = vadd.f32 0.0, %v2485
        %2487 = vmatprep.mubr.bf16.mxu0 %v652
        %2488 = vmatmul.mubr.bf16.gmra.mxu0 %v651
        %v2489 = vpop.f32.mrf.mxu0
        %v2490 = vadd.f32 0.0, %v2489
        %v2491 = vpop.f32.mrf.mxu0
        %v2492 = vadd.f32 0.0, %v2491
        %v2493 = vpop.f32.mrf.mxu0
        %v2494 = vadd.f32 0.0, %v2493
        %v2495 = vpop.f32.mrf.mxu0
        %v2496 = vadd.f32 0.0, %v2495
        %2497 = vmatprep.mubr.bf16.mxu0 %v654
        %2498 = vmatmul.mubr.bf16.gmra.mxu0 %v653
        %v2499 = vpop.f32.mrf.mxu0
        %v2500 = vadd.f32 0.0, %v2499
        %v2501 = vpop.f32.mrf.mxu0
        %v2502 = vadd.f32 0.0, %v2501
        %v2503 = vpop.f32.mrf.mxu0
        %v2504 = vadd.f32 0.0, %v2503
        %v2505 = vpop.f32.mrf.mxu0
        %v2506 = vadd.f32 0.0, %v2505
        %2507 = vmatprep.mubr.bf16.mxu0 %v656
        %2508 = vmatmul.mubr.bf16.gmra.mxu0 %v655
        %v2509 = vpop.f32.mrf.mxu0
        %v2510 = vadd.f32 0.0, %v2509
        %v2511 = vpop.f32.mrf.mxu0
        %v2512 = vadd.f32 0.0, %v2511
        %v2513 = vpop.f32.mrf.mxu0
        %v2514 = vadd.f32 0.0, %v2513
        %v2515 = vpop.f32.mrf.mxu0
        %v2516 = vadd.f32 0.0, %v2515
        %2517 = vmatprep.mubr.bf16.mxu0 %v658
        %2518 = vmatmul.mubr.bf16.gmra.mxu0 %v657
        %v2519 = vpop.f32.mrf.mxu0
        %v2520 = vadd.f32 0.0, %v2519
        %v2521 = vpop.f32.mrf.mxu0
        %v2522 = vadd.f32 0.0, %v2521
        %v2523 = vpop.f32.mrf.mxu0
        %v2524 = vadd.f32 0.0, %v2523
        %v2525 = vpop.f32.mrf.mxu0
        %v2526 = vadd.f32 0.0, %v2525
        %2527 = vmatprep.mubr.bf16.mxu0 %v660
        %2528 = vmatmul.mubr.bf16.gmra.mxu0 %v659
        %v2529 = vpop.f32.mrf.mxu0
        %v2530 = vadd.f32 0.0, %v2529
        %v2531 = vpop.f32.mrf.mxu0
        %v2532 = vadd.f32 0.0, %v2531
        %v2533 = vpop.f32.mrf.mxu0
        %v2534 = vadd.f32 0.0, %v2533
        %v2535 = vpop.f32.mrf.mxu0
        %v2536 = vadd.f32 0.0, %v2535
        %2537 = vmatprep.mubr.bf16.mxu0 %v662
        %2538 = vmatmul.mubr.bf16.gmra.mxu0 %v661
        %v2539 = vpop.f32.mrf.mxu0
        %v2540 = vadd.f32 0.0, %v2539
        %v2541 = vpop.f32.mrf.mxu0
        %v2542 = vadd.f32 0.0, %v2541
        %v2543 = vpop.f32.mrf.mxu0
        %v2544 = vadd.f32 0.0, %v2543
        %v2545 = vpop.f32.mrf.mxu0
        %v2546 = vadd.f32 0.0, %v2545
        %2547 = vmatprep.mubr.bf16.mxu0 %v664
        %2548 = vmatmul.mubr.bf16.gmra.mxu0 %v663
        %v2549 = vpop.f32.mrf.mxu0
        %v2550 = vadd.f32 0.0, %v2549
        %v2551 = vpop.f32.mrf.mxu0
        %v2552 = vadd.f32 0.0, %v2551
        %v2553 = vpop.f32.mrf.mxu0
        %v2554 = vadd.f32 0.0, %v2553
        %v2555 = vpop.f32.mrf.mxu0
        %v2556 = vadd.f32 0.0, %v2555
        %2557 = vdwg.mxu0
        %v2558 = vpack.c.bf16 %v2484, %v2480
        %v2559 = vpack.c.bf16 %v2486, %v2482
        %v2560 = vpack.c.bf16 %v2494, %v2490
        %v2561 = vpack.c.bf16 %v2496, %v2492
        %v2562 = vpack.c.bf16 %v2504, %v2500
        %v2563 = vpack.c.bf16 %v2506, %v2502
        %v2564 = vpack.c.bf16 %v2514, %v2510
        %v2565 = vpack.c.bf16 %v2516, %v2512
        %v2566 = vpack.c.bf16 %v2524, %v2520
        %v2567 = vpack.c.bf16 %v2526, %v2522
        %v2568 = vpack.c.bf16 %v2534, %v2530
        %v2569 = vpack.c.bf16 %v2536, %v2532
        %v2570 = vpack.c.bf16 %v2544, %v2540
        %v2571 = vpack.c.bf16 %v2546, %v2542
        %v2572 = vpack.c.bf16 %v2554, %v2550
        %v2573 = vpack.c.bf16 %v2556, %v2552
        %v2590 = vunpack.c.l.b16 %v2558
        %v2591 = vunpack.c.l.b16 %v2559
        %v2592 = vunpack.c.h.b16 %v2558
        %v2593 = vunpack.c.h.b16 %v2559
        %v2594 = vunpack.c.l.b16 %v2560
        %v2595 = vunpack.c.l.b16 %v2561
        %v2596 = vunpack.c.h.b16 %v2560
        %v2597 = vunpack.c.h.b16 %v2561
        %v2598 = vunpack.c.l.b16 %v2562
        %v2599 = vunpack.c.l.b16 %v2563
        %v2600 = vunpack.c.h.b16 %v2562
        %v2601 = vunpack.c.h.b16 %v2563
        %v2602 = vunpack.c.l.b16 %v2564
        %v2603 = vunpack.c.l.b16 %v2565
        %v2604 = vunpack.c.h.b16 %v2564
        %v2605 = vunpack.c.h.b16 %v2565
        %v2606 = vunpack.c.l.b16 %v2566
        %v2607 = vunpack.c.l.b16 %v2567
        %v2608 = vunpack.c.h.b16 %v2566
        %v2609 = vunpack.c.h.b16 %v2567
        %v2610 = vunpack.c.l.b16 %v2568
        %v2611 = vunpack.c.l.b16 %v2569
        %v2612 = vunpack.c.h.b16 %v2568
        %v2613 = vunpack.c.h.b16 %v2569
        %v2614 = vunpack.c.l.b16 %v2570
        %v2615 = vunpack.c.l.b16 %v2571
        %v2616 = vunpack.c.h.b16 %v2570
        %v2617 = vunpack.c.h.b16 %v2571
        %v2618 = vunpack.c.l.b16 %v2572
        %v2619 = vunpack.c.l.b16 %v2573
        %v2620 = vunpack.c.h.b16 %v2572
        %v2621 = vunpack.c.h.b16 %v2573
        %v2622 = vpack.c.b16 %v2591, %v2590
        %v2623 = vpack.c.b16 %v2593, %v2592
        %v2624 = vpack.c.b16 %v2595, %v2594
        %v2625 = vpack.c.b16 %v2597, %v2596
        %v2626 = vpack.c.b16 %v2599, %v2598
        %v2627 = vpack.c.b16 %v2601, %v2600
        %v2628 = vpack.c.b16 %v2603, %v2602
        %v2629 = vpack.c.b16 %v2605, %v2604
        %v2630 = vpack.c.b16 %v2607, %v2606
        %v2631 = vpack.c.b16 %v2609, %v2608
        %v2632 = vpack.c.b16 %v2611, %v2610
        %v2633 = vpack.c.b16 %v2613, %v2612
        %v2634 = vpack.c.b16 %v2615, %v2614
        %v2635 = vpack.c.b16 %v2617, %v2616
        %v2636 = vpack.c.b16 %v2619, %v2618
        %v2637 = vpack.c.b16 %v2621, %v2620
        %2654 = vst [vmem:[%s482] sm:$0xff] %v2622
        %2655 = vst [vmem:[%s482 + $0x8] sm:$0xff] %v2623
        %2656 = vst [vmem:[%s482 + $0x10] sm:$0xff] %v2624
        %2657 = vst [vmem:[%s482 + $0x18] sm:$0xff] %v2625
        %2658 = vst [vmem:[%s482 + $0x20] sm:$0xff] %v2626
        %2659 = vst [vmem:[%s482 + $0x28] sm:$0xff] %v2627
        %2660 = vst [vmem:[%s482 + $0x30] sm:$0xff] %v2628
        %2661 = vst [vmem:[%s482 + $0x38] sm:$0xff] %v2629
        %2662 = vst [vmem:[%s482 + $0x40] sm:$0xff] %v2630
        %2663 = vst [vmem:[%s482 + $0x48] sm:$0xff] %v2631
        %2664 = vst [vmem:[%s482 + $0x50] sm:$0xff] %v2632
        %2665 = vst [vmem:[%s482 + $0x58] sm:$0xff] %v2633
        %2666 = vst [vmem:[%s482 + $0x60] sm:$0xff] %v2634
        %2667 = vst [vmem:[%s482 + $0x68] sm:$0xff] %v2635
        %2668 = vst [vmem:[%s482 + $0x70] sm:$0xff] %v2636
        %2669 = vst [vmem:[%s482 + $0x78] sm:$0xff] %v2637
        %s2670 = sand.u32 %s196, 1
        %s2671 = scalar_lea.sflag [#allocation4], %s2670
        %s2672 = sand.u32 %s196, 1
        %s2673 = smul.addr %s2672, 128
        %s2674 = scalar_lea.vmem [#allocation12], %s2673
        %s2675 = sand.u32 %s31, 1
        %s2676 = scalar_lea.sflag [#allocation14], %s2675
        %s2677 = sand.u32 %s224, 1
        %s2678 = smul.addr %s2677, 128
        %s2679 = scalar_lea.vmem [#allocation13], %s2678
        %s2680 = sand.u32 %s31, 1
        %s2681 = scalar_lea.sflag [#allocation14], %s2680
        %s2682 = sand.u32 %s252, 1
        %s2683 = smul.addr %s2682, 128
        %s2684 = scalar_lea.vmem [#allocation15], %s2683
        // Predicated region
        $region69: #{tpu_custom_call.1} parent=43 // pred_check
          %p2685 = pneg %p206
        $region70: #{tpu_custom_call.1} parent=43 // pred_check_branch
          %2687 = sbr.rel (%p2685) target = $region72
        $region71: #{tpu_custom_call.1} parent=43 // pred_region
          %s2688 = smul.u32 16, %s36
          %s2690 = ssub.s32 2048, 2048
          %2691 = vsyncadd %s2671, %s2690
          %s2692 = smul.addr %s2688, 2
          %s2693 = smul.addr %s35, 64
          %s2694 = sadd.s32 %s2692, %s2693
          %s2695 = smul.addr %s2694, 64
          %s2696 = scalar_lea.hbm %s6, %s2695
          %s2697 = sshll.u32 %s2674, 4
          %s2698 = int_to_ptr.vmem [resolvable:$true] %s2697
          %2703 = dma.vmem_to_hbm [thread:$0]  %s2698, 2048, %s2696, %s2671, 128, 128, 8
        $region72: #{tpu_custom_call.1} parent=43 // pred_fallthru
          _
        // Predicated region
        $region73: #{tpu_custom_call.1} parent=43 // pred_check
          %p2704 = pneg %p234
        $region74: #{tpu_custom_call.1} parent=43 // pred_check_branch
          %2706 = sbr.rel (%p2704) target = $region76
        $region75: #{tpu_custom_call.1} parent=43 // pred_region
          %s2707 = smul.u32 16, %s36
          %s2709 = ssub.s32 2048, 2048
          %2710 = vsyncadd %s2676, %s2709
          %s2711 = smul.addr %s2707, 2
          %s2712 = smul.addr %s35, 64
          %s2713 = sadd.s32 %s2711, %s2712
          %s2714 = smul.addr %s2713, 64
          %s2715 = scalar_lea.hbm %s7, %s2714
          %s2716 = sshll.u32 %s2679, 4
          %s2717 = int_to_ptr.vmem [resolvable:$true] %s2716
          %2722 = dma.vmem_to_hbm [thread:$0]  %s2717, 2048, %s2715, %s2676, 128, 128, 8
        $region76: #{tpu_custom_call.1} parent=43 // pred_fallthru
          _
        // Predicated region
        $region77: #{tpu_custom_call.1} parent=43 // pred_check
          %p2723 = pneg %p262
        $region78: #{tpu_custom_call.1} parent=43 // pred_check_branch
          %2725 = sbr.rel (%p2723) target = $region80
        $region79: #{tpu_custom_call.1} parent=43 // pred_region
          %s2726 = smul.u32 16, %s36
          %s2728 = ssub.s32 2048, 2048
          %2729 = vsyncadd %s2681, %s2728
          %s2730 = smul.addr %s2726, 2
          %s2731 = smul.addr %s35, 64
          %s2732 = sadd.s32 %s2730, %s2731
          %s2733 = smul.addr %s2732, 64
          %s2734 = scalar_lea.hbm %s8, %s2733
          %s2735 = sshll.u32 %s2684, 4
          %s2736 = int_to_ptr.vmem [resolvable:$true] %s2735
          %2741 = dma.vmem_to_hbm [thread:$0]  %s2736, 2048, %s2734, %s2681, 128, 128, 8
        $region80: #{tpu_custom_call.1} parent=43 // pred_fallthru
          _
      $region44: #{tpu_custom_call.1} parent=5 // pred_fallthru
        _
      %p2742 = scmp.le.s32.totalorder 2, %s26
      // Predicated region
      $region81: #{tpu_custom_call.1} parent=5 // pred_check
        %p2743 = pneg %p2742
      $region82: #{tpu_custom_call.1} parent=5 // pred_check_branch
        %2745 = sbr.rel (%p2743) target = $region84
      $region83: #{tpu_custom_call.1} parent=5 // pred_region
        %s2746 = ssub.s32 %s26, 2
        // Predicated region
        $region85: #{tpu_custom_call.1} parent=83 // pred_check
          %p2747 = pneg %p212
        $region86: #{tpu_custom_call.1} parent=83 // pred_check_branch
          %2749 = sbr.rel (%p2747) target = $region88
        $region87: #{tpu_custom_call.1} parent=83 // pred_region
          %s2750 = sand.u32 %s197, 1
          %s2751 = scalar_lea.sflag [#allocation4], %s2750
          %s2752 = sand.u32 %s197, 1
          %s2753 = smul.addr %s2752, 128
          %s2754 = scalar_lea.vmem [#allocation12], %s2753
          %2755 = dma.done %s2751, 2048
        $region88: #{tpu_custom_call.1} parent=83 // pred_fallthru
          _
        // Predicated region
        $region89: #{tpu_custom_call.1} parent=83 // pred_check
          %p2756 = pneg %p240
        $region90: #{tpu_custom_call.1} parent=83 // pred_check_branch
          %2758 = sbr.rel (%p2756) target = $region92
        $region91: #{tpu_custom_call.1} parent=83 // pred_region
          %s2759 = sand.u32 %s32, 1
          %s2760 = scalar_lea.sflag [#allocation14], %s2759
          %s2761 = sand.u32 %s225, 1
          %s2762 = smul.addr %s2761, 128
          %s2763 = scalar_lea.vmem [#allocation13], %s2762
          %2764 = dma.done %s2760, 2048
        $region92: #{tpu_custom_call.1} parent=83 // pred_fallthru
          _
        // Predicated region
        $region93: #{tpu_custom_call.1} parent=83 // pred_check
          %p2765 = pneg %p268
        $region94: #{tpu_custom_call.1} parent=83 // pred_check_branch
          %2767 = sbr.rel (%p2765) target = $region96
        $region95: #{tpu_custom_call.1} parent=83 // pred_region
          %s2768 = sand.u32 %s32, 1
          %s2769 = scalar_lea.sflag [#allocation14], %s2768
          %s2770 = sand.u32 %s253, 1
          %s2771 = smul.addr %s2770, 128
          %s2772 = scalar_lea.vmem [#allocation15], %s2771
          %2773 = dma.done %s2769, 2048
        $region96: #{tpu_custom_call.1} parent=83 // pred_fallthru
          _
      $region84: #{tpu_custom_call.1} parent=5 // pred_fallthru
        _
    $region6: #{tpu_custom_call.1} parent=1 // loop_footer
      %s30 = sadd.s32 1, %s26
    $region7: #{tpu_custom_call.1} parent=1 // loop_footer_branch
      %25 = sbr.rel target = $region3
    $region8: #{tpu_custom_call.1} parent=1 // loop_exit
      _
    %2774 = vsyncpa [#allocation3], 1
    %s2775 = scalar_lea.sflag [#allocation3], 1
    %2776 = vsyncpa %s2775, 1
    %2777 = vsyncpa [#allocation6], 1
    %2778 = vsyncpa [#allocation9], 1
    %2779 = vsyncpa [#allocation4], 1
    %s2780 = scalar_lea.sflag [#allocation4], 1
    %2781 = vsyncpa %s2780, 1
    %2782 = vsyncpa [#allocation14], 1
    %s2783 = scalar_lea.sflag [#allocation14], 1
    %2784 = vsyncpa %s2783, 1

</llo_original>
